<compile_context>
chip_gen: v7x
topology: tpu7x:2x2x1
jax: 0.10.0
libtpu: 0.0.40
codegen_flags: <defaults>
</compile_context>

<pallas_src>
import functools

import numpy as np
import jax
import jax.numpy as jnp
from jax.experimental import pallas as pl
from jax.experimental.pallas import tpu as pltpu

D_MODEL = 32
NUM_HEADS = 4
D_HEAD = D_MODEL // NUM_HEADS


# --------------------------------- kernel ------------------------------------

def mha_kernel(q_ref, k_ref, v_ref, w_ref, b_ref, out_ref, *, bblk, T, S):
    D = D_MODEL
    H = NUM_HEADS
    dh = D_HEAD

    # Packed, pre-transposed weights: (D, 4D) = [Wq^T*scale | Wk^T | Wv^T | Wo^T]
    # (static ref slices -> just narrower loads, no XLU transposes in-kernel).
    wq = w_ref[:, 0 * D:1 * D]
    wk = w_ref[:, 1 * D:2 * D]
    wv = w_ref[:, 2 * D:3 * D]
    wo = w_ref[:, 3 * D:4 * D]
    bq = b_ref[:, 0 * D:1 * D]
    bk = b_ref[:, 1 * D:2 * D]
    bv = b_ref[:, 2 * D:3 * D]
    bo = b_ref[:, 3 * D:4 * D]

    # One projection matmul per tensor over the whole merged-batch row block.
    # 1/sqrt(d_head) is already folded into wq / bq.
    q = jnp.dot(q_ref[...], wq, preferred_element_type=jnp.float32) + bq   # (bblk*T, D)
    k = jnp.dot(k_ref[...], wk, preferred_element_type=jnp.float32) + bk   # (bblk*S, D)
    v = jnp.dot(v_ref[...], wv, preferred_element_type=jnp.float32) + bv   # (bblk*S, D)

    ctx_cols = []
    for h in range(H):                      # one lane slice per tensor per head
        sl = slice(h * dh, (h + 1) * dh)
        qh, kh, vh = q[:, sl], k[:, sl], v[:, sl]
        rows = []
        for bb in range(bblk):              # attention core must not mix batch elements
            qb = qh[bb * T:(bb + 1) * T]    # sublane-aligned row slices (cheap)
            kb = kh[bb * S:(bb + 1) * S]
            vb = vh[bb * S:(bb + 1) * S]
            # scores = q_h @ k_h^T (scale pre-folded), contraction over last dims
            s = jnp.einsum('td,sd->ts', qb, kb,
                           preferred_element_type=jnp.float32)             # (T, S)
            s = s - jnp.max(s, axis=-1, keepdims=True)
            e = jnp.exp(s)
            inv = pl.reciprocal(jnp.sum(e, axis=-1, keepdims=True), approx=True)
            rows.append(jnp.dot(e * inv, vb,
                                preferred_element_type=jnp.float32))        # (T, dh)
        ctx_cols.append(rows[0] if bblk == 1
                        else jnp.concatenate(rows, axis=0))                 # (bblk*T, dh)

    # Single K=32 output projection (one MXU fire), heads concatenated lane-wise once.
    ctx = jnp.concatenate(ctx_cols, axis=-1)                                # (bblk*T, D)
    out_ref[...] = jnp.dot(ctx, wo, preferred_element_type=jnp.float32) + bo


# ------------------------- one-time parameter packing -------------------------

def pack_params(params):
    """Host-side, one-time pack: [Wq^T*scale | Wk^T | Wv^T | Wo^T] (D,4D) and (1,4D) biases."""
    wq, bq, wk, bk, wv, bv, wo, bo = params
    scale = 1.0 / float(np.sqrt(D_HEAD))
    w_packed = jnp.concatenate([wq.T * scale, wk.T, wv.T, wo.T], axis=1)    # (32, 128)
    b_packed = jnp.concatenate([bq * scale, bk, bv, bo], axis=1)            # (1, 128)
    return w_packed, b_packed


def _tensorcores_per_chip():
    try:
        kind = jax.devices()[0].device_kind.lower()
    except Exception:
        return 1
    return 2 if "v7" in kind else 1


# -------------------------------- wrapper ------------------------------------

def multi_head_attention(query, key, value, packed_params):
    """query: (B, T, D); key/value: (B, S, D); packed_params = pack_params(raw_params)."""
    w_packed, b_packed = packed_params
    B, T, D = query.shape
    S = key.shape[1]
    assert D == D_MODEL
    assert key.shape == (B, S, D) and value.shape == (B, S, D)

    # Merge batch into matmul rows (free metadata reshape in the wrapper).
    q2 = query.reshape(B * T, D)
    k2 = key.reshape(B * S, D)
    v2 = value.reshape(B * S, D)

    def call(bblk, semantics):
        nsteps = B // bblk
        kernel = functools.partial(mha_kernel, bblk=bblk, T=T, S=S)
        out2 = pl.pallas_call(
            kernel,
            out_shape=jax.ShapeDtypeStruct((B * T, D), jnp.float32),
            grid_spec=pltpu.PrefetchScalarGridSpec(
                num_scalar_prefetch=0,
                grid=(nsteps,),
                in_specs=[
                    pl.BlockSpec((bblk * T, D), lambda i: (i, 0)),
                    pl.BlockSpec((bblk * S, D), lambda i: (i, 0)),
                    pl.BlockSpec((bblk * S, D), lambda i: (i, 0)),
                    pl.BlockSpec((D, 4 * D), lambda i: (0, 0)),
                    pl.BlockSpec((1, 4 * D), lambda i: (0, 0)),
                ],
                out_specs=pl.BlockSpec((bblk * T, D), lambda i: (i, 0)),
            ),
            compiler_params=pltpu.CompilerParams(dimension_semantics=semantics),
        )(q2, k2, v2, w_packed, b_packed)
        return out2.reshape(B, T, D)

    # Generation-aware grid: 2-TC chips (v7x) shard the batch across cores,
    # 1-TC chips (v5e/v6e) run one grid step with the whole batch.
    if _tensorcores_per_chip() >= 2 and B >= 2 and B % 2 == 0:
        try:
            return call(B // 2, (pltpu.CORE_PARALLEL,))
        except Exception:
            pass  # fall back to the single-step path below
    return call(B, ("arbitrary",))


# --------------------------- parameter construction --------------------------

def init_params(key):
    def linear(k, out_f, in_f):
        kw, kb = jax.random.split(k)
        bound = 1.0 / np.sqrt(in_f)
        w = jax.random.uniform(kw, (out_f, in_f), jnp.float32, -bound, bound)
        b = jax.random.uniform(kb, (1, out_f), jnp.float32, -bound, bound)
        return w, b

    keys = jax.random.split(key, 4)
    wq, bq = linear(keys[0], D_MODEL, D_MODEL)
    wk, bk = linear(keys[1], D_MODEL, D_MODEL)
    wv, bv = linear(keys[2], D_MODEL, D_MODEL)
    wo, bo = linear(keys[3], D_MODEL, D_MODEL)
    return (wq, bq, wk, bk, wv, bv, wo, bo)


# ------------------------------ pure-JAX reference ---------------------------

def reference(query, key, value, params):
    wq, bq, wk, bk, wv, bv, wo, bo = params
    B, T, D = query.shape
    S = key.shape[1]
    H, dh = NUM_HEADS, D_HEAD

    q = (query @ wq.T + bq).reshape(B, T, H, dh)
    k = (key @ wk.T + bk).reshape(B, S, H, dh)
    v = (value @ wv.T + bv).reshape(B, S, H, dh)
    # permute(2,0,1,3).view(B*H, -1, dh), exactly like the PyTorch module
    q = q.transpose(2, 0, 1, 3).reshape(H * B, T, dh)
    k = k.transpose(2, 0, 1, 3).reshape(H * B, S, dh)
    v = v.transpose(2, 0, 1, 3).reshape(H * B, S, dh)

    score = jnp.einsum('btd,bsd->bts', q, k) / np.sqrt(dh)
    attn = jax.nn.softmax(score, axis=-1)
    ctx = jnp.einsum('bts,bsd->btd', attn, v)
    ctx = ctx.reshape(H, B, T, dh).transpose(1, 2, 0, 3).reshape(B, T, D)
    return ctx @ wo.T + bo


# ---------------------------------- main --------------------------------------

if __name__ == "__main__":
    key = jax.random.PRNGKey(0)
    kq, kk, kv, kp = jax.random.split(key, 4)

    B, T, S = 2, 8, 16
    query = jax.random.normal(kq, (B, T, D_MODEL), jnp.float32)
    key_t = jax.random.normal(kk, (B, S, D_MODEL), jnp.float32)
    value = jax.random.normal(kv, (B, S, D_MODEL), jnp.float32)

    params = init_params(kp)
    packed = pack_params(params)   # one-time pack, outside the forward path

    out = multi_head_attention(query, key_t, value, packed)
    out = jax.block_until_ready(out)

    ref = reference(query, key_t, value, params)
    np.testing.assert_allclose(np.asarray(out), np.asarray(ref), rtol=2e-3, atol=2e-3)
    print("KERNEL_OK")
</pallas_src>

<mosaic_0001>
module attributes {stable_mosaic.version = 11 : i64} {
  func.func @mha_kernel(%arg0: i32, %arg1: memref<16x32xf32, #tpu.memory_space<vmem>>, %arg2: memref<32x32xf32, #tpu.memory_space<vmem>>, %arg3: memref<32x32xf32, #tpu.memory_space<vmem>>, %arg4: memref<32x128xf32, #tpu.memory_space<vmem>>, %arg5: memref<1x128xf32, #tpu.memory_space<vmem>>, %arg6: memref<16x32xf32, #tpu.memory_space<vmem>>) attributes {dimension_semantics = [#tpu.dimension_semantics<arbitrary>], iteration_bounds = array<i64: 1>, scalar_prefetch = 0 : i64, scratch_operands = 0 : i64, tpu.core_type = #tpu.core_type<tc>, window_params = [{transform_indices = @transform_0, window_bounds = array<i64: 16, 32>}, {transform_indices = @transform_1, window_bounds = array<i64: 32, 32>}, {transform_indices = @transform_2, window_bounds = array<i64: 32, 32>}, {pipeline_mode = #tpu.pipeline_mode<synchronous>, transform_indices = @transform_3, window_bounds = array<i64: 32, 128>}, {pipeline_mode = #tpu.pipeline_mode<synchronous>, transform_indices = @transform_4, window_bounds = array<i64: 1, 128>}, {transform_indices = @transform_5, window_bounds = array<i64: 16, 32>}]} {
    %c0 = arith.constant 0 : index
    %c0_0 = arith.constant 0 : index
    %0 = vector.load %arg4[%c0, %c0_0] : memref<32x128xf32, #tpu.memory_space<vmem>>, vector<32x32xf32>
    %c0_1 = arith.constant 0 : index
    %c32 = arith.constant 32 : index
    %1 = vector.load %arg4[%c0_1, %c32] : memref<32x128xf32, #tpu.memory_space<vmem>>, vector<32x32xf32>
    %c0_2 = arith.constant 0 : index
    %c64 = arith.constant 64 : index
    %2 = vector.load %arg4[%c0_2, %c64] : memref<32x128xf32, #tpu.memory_space<vmem>>, vector<32x32xf32>
    %c0_3 = arith.constant 0 : index
    %c96 = arith.constant 96 : index
    %3 = vector.load %arg4[%c0_3, %c96] : memref<32x128xf32, #tpu.memory_space<vmem>>, vector<32x32xf32>
    %c0_4 = arith.constant 0 : index
    %c0_5 = arith.constant 0 : index
    %4 = vector.load %arg5[%c0_4, %c0_5] : memref<1x128xf32, #tpu.memory_space<vmem>>, vector<1x32xf32>
    %c0_6 = arith.constant 0 : index
    %c32_7 = arith.constant 32 : index
    %5 = vector.load %arg5[%c0_6, %c32_7] : memref<1x128xf32, #tpu.memory_space<vmem>>, vector<1x32xf32>
    %c0_8 = arith.constant 0 : index
    %c64_9 = arith.constant 64 : index
    %6 = vector.load %arg5[%c0_8, %c64_9] : memref<1x128xf32, #tpu.memory_space<vmem>>, vector<1x32xf32>
    %c0_10 = arith.constant 0 : index
    %c96_11 = arith.constant 96 : index
    %7 = vector.load %arg5[%c0_10, %c96_11] : memref<1x128xf32, #tpu.memory_space<vmem>>, vector<1x32xf32>
    %c0_12 = arith.constant 0 : index
    %c0_13 = arith.constant 0 : index
    %8 = vector.load %arg1[%c0_12, %c0_13] : memref<16x32xf32, #tpu.memory_space<vmem>>, vector<16x32xf32>
    %cst = arith.constant dense<0.000000e+00> : vector<16x32xf32>
    %9 = tpu.matmul %8, %0, %cst {dimension_numbers = #tpu.dot_dimension_numbers<[1], [0], [0], [1], [0, 0, 1, 1], [], []>} : vector<16x32xf32>, vector<32x32xf32>, vector<16x32xf32> -> vector<16x32xf32>
    %10 = vector.broadcast %4 : vector<1x32xf32> to vector<16x32xf32>
    %11 = arith.addf %9, %10 : vector<16x32xf32>
    %c0_14 = arith.constant 0 : index
    %c0_15 = arith.constant 0 : index
    %12 = vector.load %arg2[%c0_14, %c0_15] : memref<32x32xf32, #tpu.memory_space<vmem>>, vector<32x32xf32>
    %cst_16 = arith.constant dense<0.000000e+00> : vector<32x32xf32>
    %13 = tpu.matmul %12, %1, %cst_16 {dimension_numbers = #tpu.dot_dimension_numbers<[1], [0], [0], [1], [0, 0, 1, 1], [], []>} : vector<32x32xf32>, vector<32x32xf32>, vector<32x32xf32> -> vector<32x32xf32>
    %14 = vector.broadcast %5 : vector<1x32xf32> to vector<32x32xf32>
    %15 = arith.addf %13, %14 : vector<32x32xf32>
    %c0_17 = arith.constant 0 : index
    %c0_18 = arith.constant 0 : index
    %16 = vector.load %arg3[%c0_17, %c0_18] : memref<32x32xf32, #tpu.memory_space<vmem>>, vector<32x32xf32>
    %cst_19 = arith.constant dense<0.000000e+00> : vector<32x32xf32>
    %17 = tpu.matmul %16, %2, %cst_19 {dimension_numbers = #tpu.dot_dimension_numbers<[1], [0], [0], [1], [0, 0, 1, 1], [], []>} : vector<32x32xf32>, vector<32x32xf32>, vector<32x32xf32> -> vector<32x32xf32>
    %18 = vector.broadcast %6 : vector<1x32xf32> to vector<32x32xf32>
    %19 = arith.addf %17, %18 : vector<32x32xf32>
    %20 = vector.extract_strided_slice %11 {offsets = [0, 0], sizes = [16, 8], strides = [1, 1]} : vector<16x32xf32> to vector<16x8xf32>
    %21 = vector.extract_strided_slice %15 {offsets = [0, 0], sizes = [32, 8], strides = [1, 1]} : vector<32x32xf32> to vector<32x8xf32>
    %22 = vector.extract_strided_slice %19 {offsets = [0, 0], sizes = [32, 8], strides = [1, 1]} : vector<32x32xf32> to vector<32x8xf32>
    %23 = vector.extract_strided_slice %20 {offsets = [0, 0], sizes = [8, 8], strides = [1, 1]} : vector<16x8xf32> to vector<8x8xf32>
    %24 = vector.extract_strided_slice %21 {offsets = [0, 0], sizes = [16, 8], strides = [1, 1]} : vector<32x8xf32> to vector<16x8xf32>
    %25 = vector.extract_strided_slice %22 {offsets = [0, 0], sizes = [16, 8], strides = [1, 1]} : vector<32x8xf32> to vector<16x8xf32>
    "tpu.trace_start"() <{level = 10 : i32, message = "td,sd->ts"}> : () -> ()
    %cst_20 = arith.constant dense<0.000000e+00> : vector<8x16xf32>
    %26 = tpu.matmul %23, %24, %cst_20 {dimension_numbers = #tpu.dot_dimension_numbers<[1], [1], [0], [0], [0, 0, 1, 0], [], []>} : vector<8x8xf32>, vector<16x8xf32>, vector<8x16xf32> -> vector<8x16xf32>
    "tpu.trace_stop"() : () -> ()
    %cst_21 = arith.constant dense<0xFF800000> : vector<8xf32>
    %27 = vector.multi_reduction <maximumf>, %26, %cst_21 [1] : vector<8x16xf32> to vector<8xf32>
    %28 = vector.shape_cast %27 : vector<8xf32> to vector<8x1xf32>
    %29 = vector.broadcast %28 : vector<8x1xf32> to vector<8x16xf32>
    %30 = arith.subf %26, %29 : vector<8x16xf32>
    %31 = math.exp %30 : vector<8x16xf32>
    %cst_22 = arith.constant dense<0.000000e+00> : vector<8xf32>
    %32 = vector.multi_reduction <add>, %31, %cst_22 [1] : vector<8x16xf32> to vector<8xf32>
    %33 = vector.shape_cast %32 : vector<8xf32> to vector<8x1xf32>
    %34 = tpu.reciprocal %33 {approx = true} : vector<8x1xf32> -> vector<8x1xf32>
    %35 = vector.broadcast %34 : vector<8x1xf32> to vector<8x16xf32>
    %36 = arith.mulf %31, %35 : vector<8x16xf32>
    %cst_23 = arith.constant dense<0.000000e+00> : vector<8x8xf32>
    %37 = tpu.matmul %36, %25, %cst_23 {dimension_numbers = #tpu.dot_dimension_numbers<[1], [0], [0], [1], [0, 0, 1, 1], [], []>} : vector<8x16xf32>, vector<16x8xf32>, vector<8x8xf32> -> vector<8x8xf32>
    %38 = vector.extract_strided_slice %20 {offsets = [8, 0], sizes = [8, 8], strides = [1, 1]} : vector<16x8xf32> to vector<8x8xf32>
    %39 = vector.extract_strided_slice %21 {offsets = [16, 0], sizes = [16, 8], strides = [1, 1]} : vector<32x8xf32> to vector<16x8xf32>
    %40 = vector.extract_strided_slice %22 {offsets = [16, 0], sizes = [16, 8], strides = [1, 1]} : vector<32x8xf32> to vector<16x8xf32>
    "tpu.trace_start"() <{level = 10 : i32, message = "td,sd->ts"}> : () -> ()
    %cst_24 = arith.constant dense<0.000000e+00> : vector<8x16xf32>
    %41 = tpu.matmul %38, %39, %cst_24 {dimension_numbers = #tpu.dot_dimension_numbers<[1], [1], [0], [0], [0, 0, 1, 0], [], []>} : vector<8x8xf32>, vector<16x8xf32>, vector<8x16xf32> -> vector<8x16xf32>
    "tpu.trace_stop"() : () -> ()
    %cst_25 = arith.constant dense<0xFF800000> : vector<8xf32>
    %42 = vector.multi_reduction <maximumf>, %41, %cst_25 [1] : vector<8x16xf32> to vector<8xf32>
    %43 = vector.shape_cast %42 : vector<8xf32> to vector<8x1xf32>
    %44 = vector.broadcast %43 : vector<8x1xf32> to vector<8x16xf32>
    %45 = arith.subf %41, %44 : vector<8x16xf32>
    %46 = math.exp %45 : vector<8x16xf32>
    %cst_26 = arith.constant dense<0.000000e+00> : vector<8xf32>
    %47 = vector.multi_reduction <add>, %46, %cst_26 [1] : vector<8x16xf32> to vector<8xf32>
    %48 = vector.shape_cast %47 : vector<8xf32> to vector<8x1xf32>
    %49 = tpu.reciprocal %48 {approx = true} : vector<8x1xf32> -> vector<8x1xf32>
    %50 = vector.broadcast %49 : vector<8x1xf32> to vector<8x16xf32>
    %51 = arith.mulf %46, %50 : vector<8x16xf32>
    %cst_27 = arith.constant dense<0.000000e+00> : vector<8x8xf32>
    %52 = tpu.matmul %51, %40, %cst_27 {dimension_numbers = #tpu.dot_dimension_numbers<[1], [0], [0], [1], [0, 0, 1, 1], [], []>} : vector<8x16xf32>, vector<16x8xf32>, vector<8x8xf32> -> vector<8x8xf32>
    %53 = tpu.concatenate %37, %52 in 0 : vector<8x8xf32>, vector<8x8xf32> -> vector<16x8xf32>
    %54 = vector.extract_strided_slice %11 {offsets = [0, 8], sizes = [16, 8], strides = [1, 1]} : vector<16x32xf32> to vector<16x8xf32>
    %55 = vector.extract_strided_slice %15 {offsets = [0, 8], sizes = [32, 8], strides = [1, 1]} : vector<32x32xf32> to vector<32x8xf32>
    %56 = vector.extract_strided_slice %19 {offsets = [0, 8], sizes = [32, 8], strides = [1, 1]} : vector<32x32xf32> to vector<32x8xf32>
    %57 = vector.extract_strided_slice %54 {offsets = [0, 0], sizes = [8, 8], strides = [1, 1]} : vector<16x8xf32> to vector<8x8xf32>
    %58 = vector.extract_strided_slice %55 {offsets = [0, 0], sizes = [16, 8], strides = [1, 1]} : vector<32x8xf32> to vector<16x8xf32>
    %59 = vector.extract_strided_slice %56 {offsets = [0, 0], sizes = [16, 8], strides = [1, 1]} : vector<32x8xf32> to vector<16x8xf32>
    "tpu.trace_start"() <{level = 10 : i32, message = "td,sd->ts"}> : () -> ()
    %cst_28 = arith.constant dense<0.000000e+00> : vector<8x16xf32>
    %60 = tpu.matmul %57, %58, %cst_28 {dimension_numbers = #tpu.dot_dimension_numbers<[1], [1], [0], [0], [0, 0, 1, 0], [], []>} : vector<8x8xf32>, vector<16x8xf32>, vector<8x16xf32> -> vector<8x16xf32>
    "tpu.trace_stop"() : () -> ()
    %cst_29 = arith.constant dense<0xFF800000> : vector<8xf32>
    %61 = vector.multi_reduction <maximumf>, %60, %cst_29 [1] : vector<8x16xf32> to vector<8xf32>
    %62 = vector.shape_cast %61 : vector<8xf32> to vector<8x1xf32>
    %63 = vector.broadcast %62 : vector<8x1xf32> to vector<8x16xf32>
    %64 = arith.subf %60, %63 : vector<8x16xf32>
    %65 = math.exp %64 : vector<8x16xf32>
    %cst_30 = arith.constant dense<0.000000e+00> : vector<8xf32>
    %66 = vector.multi_reduction <add>, %65, %cst_30 [1] : vector<8x16xf32> to vector<8xf32>
    %67 = vector.shape_cast %66 : vector<8xf32> to vector<8x1xf32>
    %68 = tpu.reciprocal %67 {approx = true} : vector<8x1xf32> -> vector<8x1xf32>
    %69 = vector.broadcast %68 : vector<8x1xf32> to vector<8x16xf32>
    %70 = arith.mulf %65, %69 : vector<8x16xf32>
    %cst_31 = arith.constant dense<0.000000e+00> : vector<8x8xf32>
    %71 = tpu.matmul %70, %59, %cst_31 {dimension_numbers = #tpu.dot_dimension_numbers<[1], [0], [0], [1], [0, 0, 1, 1], [], []>} : vector<8x16xf32>, vector<16x8xf32>, vector<8x8xf32> -> vector<8x8xf32>
    %72 = vector.extract_strided_slice %54 {offsets = [8, 0], sizes = [8, 8], strides = [1, 1]} : vector<16x8xf32> to vector<8x8xf32>
    %73 = vector.extract_strided_slice %55 {offsets = [16, 0], sizes = [16, 8], strides = [1, 1]} : vector<32x8xf32> to vector<16x8xf32>
    %74 = vector.extract_strided_slice %56 {offsets = [16, 0], sizes = [16, 8], strides = [1, 1]} : vector<32x8xf32> to vector<16x8xf32>
    "tpu.trace_start"() <{level = 10 : i32, message = "td,sd->ts"}> : () -> ()
    %cst_32 = arith.constant dense<0.000000e+00> : vector<8x16xf32>
    %75 = tpu.matmul %72, %73, %cst_32 {dimension_numbers = #tpu.dot_dimension_numbers<[1], [1], [0], [0], [0, 0, 1, 0], [], []>} : vector<8x8xf32>, vector<16x8xf32>, vector<8x16xf32> -> vector<8x16xf32>
    "tpu.trace_stop"() : () -> ()
    %cst_33 = arith.constant dense<0xFF800000> : vector<8xf32>
    %76 = vector.multi_reduction <maximumf>, %75, %cst_33 [1] : vector<8x16xf32> to vector<8xf32>
    %77 = vector.shape_cast %76 : vector<8xf32> to vector<8x1xf32>
    %78 = vector.broadcast %77 : vector<8x1xf32> to vector<8x16xf32>
    %79 = arith.subf %75, %78 : vector<8x16xf32>
    %80 = math.exp %79 : vector<8x16xf32>
    %cst_34 = arith.constant dense<0.000000e+00> : vector<8xf32>
    %81 = vector.multi_reduction <add>, %80, %cst_34 [1] : vector<8x16xf32> to vector<8xf32>
    %82 = vector.shape_cast %81 : vector<8xf32> to vector<8x1xf32>
    %83 = tpu.reciprocal %82 {approx = true} : vector<8x1xf32> -> vector<8x1xf32>
    %84 = vector.broadcast %83 : vector<8x1xf32> to vector<8x16xf32>
    %85 = arith.mulf %80, %84 : vector<8x16xf32>
    %cst_35 = arith.constant dense<0.000000e+00> : vector<8x8xf32>
    %86 = tpu.matmul %85, %74, %cst_35 {dimension_numbers = #tpu.dot_dimension_numbers<[1], [0], [0], [1], [0, 0, 1, 1], [], []>} : vector<8x16xf32>, vector<16x8xf32>, vector<8x8xf32> -> vector<8x8xf32>
    %87 = tpu.concatenate %71, %86 in 0 : vector<8x8xf32>, vector<8x8xf32> -> vector<16x8xf32>
    %88 = vector.extract_strided_slice %11 {offsets = [0, 16], sizes = [16, 8], strides = [1, 1]} : vector<16x32xf32> to vector<16x8xf32>
    %89 = vector.extract_strided_slice %15 {offsets = [0, 16], sizes = [32, 8], strides = [1, 1]} : vector<32x32xf32> to vector<32x8xf32>
    %90 = vector.extract_strided_slice %19 {offsets = [0, 16], sizes = [32, 8], strides = [1, 1]} : vector<32x32xf32> to vector<32x8xf32>
    %91 = vector.extract_strided_slice %88 {offsets = [0, 0], sizes = [8, 8], strides = [1, 1]} : vector<16x8xf32> to vector<8x8xf32>
    %92 = vector.extract_strided_slice %89 {offsets = [0, 0], sizes = [16, 8], strides = [1, 1]} : vector<32x8xf32> to vector<16x8xf32>
    %93 = vector.extract_strided_slice %90 {offsets = [0, 0], sizes = [16, 8], strides = [1, 1]} : vector<32x8xf32> to vector<16x8xf32>
    "tpu.trace_start"() <{level = 10 : i32, message = "td,sd->ts"}> : () -> ()
    %cst_36 = arith.constant dense<0.000000e+00> : vector<8x16xf32>
    %94 = tpu.matmul %91, %92, %cst_36 {dimension_numbers = #tpu.dot_dimension_numbers<[1], [1], [0], [0], [0, 0, 1, 0], [], []>} : vector<8x8xf32>, vector<16x8xf32>, vector<8x16xf32> -> vector<8x16xf32>
    "tpu.trace_stop"() : () -> ()
    %cst_37 = arith.constant dense<0xFF800000> : vector<8xf32>
    %95 = vector.multi_reduction <maximumf>, %94, %cst_37 [1] : vector<8x16xf32> to vector<8xf32>
    %96 = vector.shape_cast %95 : vector<8xf32> to vector<8x1xf32>
    %97 = vector.broadcast %96 : vector<8x1xf32> to vector<8x16xf32>
    %98 = arith.subf %94, %97 : vector<8x16xf32>
    %99 = math.exp %98 : vector<8x16xf32>
    %cst_38 = arith.constant dense<0.000000e+00> : vector<8xf32>
    %100 = vector.multi_reduction <add>, %99, %cst_38 [1] : vector<8x16xf32> to vector<8xf32>
    %101 = vector.shape_cast %100 : vector<8xf32> to vector<8x1xf32>
    %102 = tpu.reciprocal %101 {approx = true} : vector<8x1xf32> -> vector<8x1xf32>
    %103 = vector.broadcast %102 : vector<8x1xf32> to vector<8x16xf32>
    %104 = arith.mulf %99, %103 : vector<8x16xf32>
    %cst_39 = arith.constant dense<0.000000e+00> : vector<8x8xf32>
    %105 = tpu.matmul %104, %93, %cst_39 {dimension_numbers = #tpu.dot_dimension_numbers<[1], [0], [0], [1], [0, 0, 1, 1], [], []>} : vector<8x16xf32>, vector<16x8xf32>, vector<8x8xf32> -> vector<8x8xf32>
    %106 = vector.extract_strided_slice %88 {offsets = [8, 0], sizes = [8, 8], strides = [1, 1]} : vector<16x8xf32> to vector<8x8xf32>
    %107 = vector.extract_strided_slice %89 {offsets = [16, 0], sizes = [16, 8], strides = [1, 1]} : vector<32x8xf32> to vector<16x8xf32>
    %108 = vector.extract_strided_slice %90 {offsets = [16, 0], sizes = [16, 8], strides = [1, 1]} : vector<32x8xf32> to vector<16x8xf32>
    "tpu.trace_start"() <{level = 10 : i32, message = "td,sd->ts"}> : () -> ()
    %cst_40 = arith.constant dense<0.000000e+00> : vector<8x16xf32>
    %109 = tpu.matmul %106, %107, %cst_40 {dimension_numbers = #tpu.dot_dimension_numbers<[1], [1], [0], [0], [0, 0, 1, 0], [], []>} : vector<8x8xf32>, vector<16x8xf32>, vector<8x16xf32> -> vector<8x16xf32>
    "tpu.trace_stop"() : () -> ()
    %cst_41 = arith.constant dense<0xFF800000> : vector<8xf32>
    %110 = vector.multi_reduction <maximumf>, %109, %cst_41 [1] : vector<8x16xf32> to vector<8xf32>
    %111 = vector.shape_cast %110 : vector<8xf32> to vector<8x1xf32>
    %112 = vector.broadcast %111 : vector<8x1xf32> to vector<8x16xf32>
    %113 = arith.subf %109, %112 : vector<8x16xf32>
    %114 = math.exp %113 : vector<8x16xf32>
    %cst_42 = arith.constant dense<0.000000e+00> : vector<8xf32>
    %115 = vector.multi_reduction <add>, %114, %cst_42 [1] : vector<8x16xf32> to vector<8xf32>
    %116 = vector.shape_cast %115 : vector<8xf32> to vector<8x1xf32>
    %117 = tpu.reciprocal %116 {approx = true} : vector<8x1xf32> -> vector<8x1xf32>
    %118 = vector.broadcast %117 : vector<8x1xf32> to vector<8x16xf32>
    %119 = arith.mulf %114, %118 : vector<8x16xf32>
    %cst_43 = arith.constant dense<0.000000e+00> : vector<8x8xf32>
    %120 = tpu.matmul %119, %108, %cst_43 {dimension_numbers = #tpu.dot_dimension_numbers<[1], [0], [0], [1], [0, 0, 1, 1], [], []>} : vector<8x16xf32>, vector<16x8xf32>, vector<8x8xf32> -> vector<8x8xf32>
    %121 = tpu.concatenate %105, %120 in 0 : vector<8x8xf32>, vector<8x8xf32> -> vector<16x8xf32>
    %122 = vector.extract_strided_slice %11 {offsets = [0, 24], sizes = [16, 8], strides = [1, 1]} : vector<16x32xf32> to vector<16x8xf32>
    %123 = vector.extract_strided_slice %15 {offsets = [0, 24], sizes = [32, 8], strides = [1, 1]} : vector<32x32xf32> to vector<32x8xf32>
    %124 = vector.extract_strided_slice %19 {offsets = [0, 24], sizes = [32, 8], strides = [1, 1]} : vector<32x32xf32> to vector<32x8xf32>
    %125 = vector.extract_strided_slice %122 {offsets = [0, 0], sizes = [8, 8], strides = [1, 1]} : vector<16x8xf32> to vector<8x8xf32>
    %126 = vector.extract_strided_slice %123 {offsets = [0, 0], sizes = [16, 8], strides = [1, 1]} : vector<32x8xf32> to vector<16x8xf32>
    %127 = vector.extract_strided_slice %124 {offsets = [0, 0], sizes = [16, 8], strides = [1, 1]} : vector<32x8xf32> to vector<16x8xf32>
    "tpu.trace_start"() <{level = 10 : i32, message = "td,sd->ts"}> : () -> ()
    %cst_44 = arith.constant dense<0.000000e+00> : vector<8x16xf32>
    %128 = tpu.matmul %125, %126, %cst_44 {dimension_numbers = #tpu.dot_dimension_numbers<[1], [1], [0], [0], [0, 0, 1, 0], [], []>} : vector<8x8xf32>, vector<16x8xf32>, vector<8x16xf32> -> vector<8x16xf32>
    "tpu.trace_stop"() : () -> ()
    %cst_45 = arith.constant dense<0xFF800000> : vector<8xf32>
    %129 = vector.multi_reduction <maximumf>, %128, %cst_45 [1] : vector<8x16xf32> to vector<8xf32>
    %130 = vector.shape_cast %129 : vector<8xf32> to vector<8x1xf32>
    %131 = vector.broadcast %130 : vector<8x1xf32> to vector<8x16xf32>
    %132 = arith.subf %128, %131 : vector<8x16xf32>
    %133 = math.exp %132 : vector<8x16xf32>
    %cst_46 = arith.constant dense<0.000000e+00> : vector<8xf32>
    %134 = vector.multi_reduction <add>, %133, %cst_46 [1] : vector<8x16xf32> to vector<8xf32>
    %135 = vector.shape_cast %134 : vector<8xf32> to vector<8x1xf32>
    %136 = tpu.reciprocal %135 {approx = true} : vector<8x1xf32> -> vector<8x1xf32>
    %137 = vector.broadcast %136 : vector<8x1xf32> to vector<8x16xf32>
    %138 = arith.mulf %133, %137 : vector<8x16xf32>
    %cst_47 = arith.constant dense<0.000000e+00> : vector<8x8xf32>
    %139 = tpu.matmul %138, %127, %cst_47 {dimension_numbers = #tpu.dot_dimension_numbers<[1], [0], [0], [1], [0, 0, 1, 1], [], []>} : vector<8x16xf32>, vector<16x8xf32>, vector<8x8xf32> -> vector<8x8xf32>
    %140 = vector.extract_strided_slice %122 {offsets = [8, 0], sizes = [8, 8], strides = [1, 1]} : vector<16x8xf32> to vector<8x8xf32>
    %141 = vector.extract_strided_slice %123 {offsets = [16, 0], sizes = [16, 8], strides = [1, 1]} : vector<32x8xf32> to vector<16x8xf32>
    %142 = vector.extract_strided_slice %124 {offsets = [16, 0], sizes = [16, 8], strides = [1, 1]} : vector<32x8xf32> to vector<16x8xf32>
    "tpu.trace_start"() <{level = 10 : i32, message = "td,sd->ts"}> : () -> ()
    %cst_48 = arith.constant dense<0.000000e+00> : vector<8x16xf32>
    %143 = tpu.matmul %140, %141, %cst_48 {dimension_numbers = #tpu.dot_dimension_numbers<[1], [1], [0], [0], [0, 0, 1, 0], [], []>} : vector<8x8xf32>, vector<16x8xf32>, vector<8x16xf32> -> vector<8x16xf32>
    "tpu.trace_stop"() : () -> ()
    %cst_49 = arith.constant dense<0xFF800000> : vector<8xf32>
    %144 = vector.multi_reduction <maximumf>, %143, %cst_49 [1] : vector<8x16xf32> to vector<8xf32>
    %145 = vector.shape_cast %144 : vector<8xf32> to vector<8x1xf32>
    %146 = vector.broadcast %145 : vector<8x1xf32> to vector<8x16xf32>
    %147 = arith.subf %143, %146 : vector<8x16xf32>
    %148 = math.exp %147 : vector<8x16xf32>
    %cst_50 = arith.constant dense<0.000000e+00> : vector<8xf32>
    %149 = vector.multi_reduction <add>, %148, %cst_50 [1] : vector<8x16xf32> to vector<8xf32>
    %150 = vector.shape_cast %149 : vector<8xf32> to vector<8x1xf32>
    %151 = tpu.reciprocal %150 {approx = true} : vector<8x1xf32> -> vector<8x1xf32>
    %152 = vector.broadcast %151 : vector<8x1xf32> to vector<8x16xf32>
    %153 = arith.mulf %148, %152 : vector<8x16xf32>
    %cst_51 = arith.constant dense<0.000000e+00> : vector<8x8xf32>
    %154 = tpu.matmul %153, %142, %cst_51 {dimension_numbers = #tpu.dot_dimension_numbers<[1], [0], [0], [1], [0, 0, 1, 1], [], []>} : vector<8x16xf32>, vector<16x8xf32>, vector<8x8xf32> -> vector<8x8xf32>
    %155 = tpu.concatenate %139, %154 in 0 : vector<8x8xf32>, vector<8x8xf32> -> vector<16x8xf32>
    %156 = tpu.concatenate %53, %87, %121, %155 in 1 : vector<16x8xf32>, vector<16x8xf32>, vector<16x8xf32>, vector<16x8xf32> -> vector<16x32xf32>
    %cst_52 = arith.constant dense<0.000000e+00> : vector<16x32xf32>
    %157 = tpu.matmul %156, %3, %cst_52 {dimension_numbers = #tpu.dot_dimension_numbers<[1], [0], [0], [1], [0, 0, 1, 1], [], []>} : vector<16x32xf32>, vector<32x32xf32>, vector<16x32xf32> -> vector<16x32xf32>
    %158 = vector.broadcast %7 : vector<1x32xf32> to vector<16x32xf32>
    %159 = arith.addf %157, %158 : vector<16x32xf32>
    %c0_53 = arith.constant 0 : index
    %c0_54 = arith.constant 0 : index
    %160 = vector.load %arg6[%c0_53, %c0_54] : memref<16x32xf32, #tpu.memory_space<vmem>>, vector<16x32xf32>
    tpu.vector_store %arg6[%c0_53, %c0_54], %159 {strides = array<i32>} : memref<16x32xf32, #tpu.memory_space<vmem>>, vector<16x32xf32>,
    return
  }
  func.func @transform_0(%arg0: i32) -> (i32, i32) {
    %c0_i32 = arith.constant 0 : i32
    %c0_i32_0 = arith.constant 0 : i32
    return %arg0, %c0_i32 : i32, i32
  }
  func.func @transform_1(%arg0: i32) -> (i32, i32) {
    %c0_i32 = arith.constant 0 : i32
    %c0_i32_0 = arith.constant 0 : i32
    return %arg0, %c0_i32 : i32, i32
  }
  func.func @transform_2(%arg0: i32) -> (i32, i32) {
    %c0_i32 = arith.constant 0 : i32
    %c0_i32_0 = arith.constant 0 : i32
    return %arg0, %c0_i32 : i32, i32
  }
  func.func @transform_3(%arg0: i32) -> (i32, i32) {
    %c0_i32 = arith.constant 0 : i32
    %c0_i32_0 = arith.constant 0 : i32
    %c0_i32_1 = arith.constant 0 : i32
    return %c0_i32, %c0_i32_0 : i32, i32
  }
  func.func @transform_4(%arg0: i32) -> (i32, i32) {
    %c0_i32 = arith.constant 0 : i32
    %c0_i32_0 = arith.constant 0 : i32
    %c0_i32_1 = arith.constant 0 : i32
    return %c0_i32, %c0_i32_0 : i32, i32
  }
  func.func @transform_5(%arg0: i32) -> (i32, i32) {
    %c0_i32 = arith.constant 0 : i32
    %c0_i32_0 = arith.constant 0 : i32
    return %arg0, %c0_i32 : i32, i32
  }
}

</mosaic_0001>

<llo_original>
// kernel: tpu_custom_call.1
$region0: #{tpu_custom_call.1}
  #allocation0 [shape = 'u32[]', space=smem, size = 0x4, offset = 0x4, fixed_abs, tag = 'smem constant byte address 0x4 - core index']
  #allocation1 [shape = 'u32[144,128]{1,0:T(1,128)}', space=vmem, size = 0x12000, scoped, tag = 'internal scratch']
  %s0 = inlined_call_operand.hbm [shape: f32[16,32], index: 0, kind: input, shape index: {}]
  %s1 = inlined_call_operand.hbm [shape: f32[32,32], index: 1, kind: input, shape index: {}]
  %s2 = inlined_call_operand.hbm [shape: f32[32,32], index: 2, kind: input, shape index: {}]
  %s3 = inlined_call_operand.hbm [shape: f32[32,128], index: 3, kind: input, shape index: {}]
  %s4 = inlined_call_operand.vmem [shape: f32[1,128], index: 4, kind: input, shape index: {}]
  %s5 = inlined_call_operand.hbm [shape: f32[16,32], index: 5, kind: output, shape index: {}]
  %s6 = sld [smem:[#allocation0]]
  $region46: #{tpu_custom_call.1} parent=0
    _
  %s8 = ssub.s32 1, %s6
  %s9 = scalar_select 0, %s8, %s6
  $region1: #{tpu_custom_call.1} parent=0
    #allocation2 [shape = 'u8[8192]{0}', space=vmem, size = 0x2000, scoped, tag = 'input window, operand 0, single buffered']
    #allocation3 [shape = 's32[1]{0}', space=sflag, size = 0x4, scoped, tag = 'scoped memory for tpu_custom_call.1']
    #allocation4 [shape = 's32[1]{0}', space=sflag, size = 0x4, scoped, tag = 'scoped memory for tpu_custom_call.1']
    #allocation5 [shape = 'u8[16384]{0}', space=vmem, size = 0x4000, scoped, tag = 'input window, operand 1, single buffered']
    #allocation6 [shape = 's32[1]{0}', space=sflag, size = 0x4, scoped, tag = 'scoped memory for tpu_custom_call.1']
    #allocation7 [shape = 'u8[16384]{0}', space=vmem, size = 0x4000, scoped, tag = 'input window, operand 2, single buffered']
    #allocation8 [shape = 'u8[16384]{0}', space=vmem, size = 0x4000, scoped, tag = 'input window, operand 3, single buffered']
    #allocation9 [shape = 's32[1]{0}', space=sflag, size = 0x4, scoped, tag = 'scoped memory for tpu_custom_call.1']
    #allocation10 [shape = 'u8[8192]{0}', space=vmem, size = 0x2000, scoped, tag = 'output window, operand 0, single buffered']
    %10 = vsyncpa [#allocation3], 0
    %11 = vsyncpa [#allocation6], 0
    %12 = vsyncpa [#allocation9], 0
    %13 = vsyncpa [#allocation4], 0
    // Predicated region
    $region2: #{tpu_custom_call.1} parent=1 // pred_check
      _
    $region3: #{tpu_custom_call.1} parent=1 // pred_check_branch
      %15 = sbr.rel (0) target = $region5
    $region4: #{tpu_custom_call.1} parent=1 // pred_region
      %s17 = ssub.s32 256, 256
      %18 = vsyncadd [#allocation3], %s17
      %s19 = sshll.u32 [#allocation2], 4
      %s20 = int_to_ptr.vmem [resolvable:$true] %s19
      %25 = dma.hbm_to_vmem [thread:$0]  %s0, 256, %s20, [#allocation3], 128, 128, 8
    $region5: #{tpu_custom_call.1} parent=1 // pred_fallthru
      _
    // Predicated region
    $region6: #{tpu_custom_call.1} parent=1 // pred_check
      _
    $region7: #{tpu_custom_call.1} parent=1 // pred_check_branch
      %27 = sbr.rel (0) target = $region9
    $region8: #{tpu_custom_call.1} parent=1 // pred_region
      %s29 = ssub.s32 512, 512
      %30 = vsyncadd [#allocation6], %s29
      %s31 = sshll.u32 [#allocation5], 4
      %s32 = int_to_ptr.vmem [resolvable:$true] %s31
      %37 = dma.hbm_to_vmem [thread:$0]  %s1, 512, %s32, [#allocation6], 128, 128, 8
    $region9: #{tpu_custom_call.1} parent=1 // pred_fallthru
      _
    // Predicated region
    $region10: #{tpu_custom_call.1} parent=1 // pred_check
      _
    $region11: #{tpu_custom_call.1} parent=1 // pred_check_branch
      %39 = sbr.rel (0) target = $region13
    $region12: #{tpu_custom_call.1} parent=1 // pred_region
      %s41 = ssub.s32 512, 512
      %42 = vsyncadd [#allocation6], %s41
      %s43 = sshll.u32 [#allocation7], 4
      %s44 = int_to_ptr.vmem [resolvable:$true] %s43
      %49 = dma.hbm_to_vmem [thread:$0]  %s2, 512, %s44, [#allocation6], 128, 128, 8
    $region13: #{tpu_custom_call.1} parent=1 // pred_fallthru
      _
    // Predicated region
    $region14: #{tpu_custom_call.1} parent=1 // pred_check
      _
    $region15: #{tpu_custom_call.1} parent=1 // pred_check_branch
      %51 = sbr.rel (0) target = $region17
    $region16: #{tpu_custom_call.1} parent=1 // pred_region
      %s53 = ssub.s32 512, 512
      %54 = vsyncadd [#allocation9], %s53
      %s55 = sshll.u32 [#allocation8], 4
      %s56 = int_to_ptr.vmem [resolvable:$true] %s55
      %61 = dma.hbm_to_vmem [thread:$0]  %s3, 512, %s56, [#allocation9], 128, 128, 8
    $region17: #{tpu_custom_call.1} parent=1 // pred_fallthru
      _
    // Predicated region
    $region18: #{tpu_custom_call.1} parent=1 // pred_check
      _
    $region19: #{tpu_custom_call.1} parent=1 // pred_check_branch
      %63 = sbr.rel (0) target = $region21
    $region20: #{tpu_custom_call.1} parent=1 // pred_region
      _
    $region21: #{tpu_custom_call.1} parent=1 // pred_fallthru
      _
    // Predicated region
    $region22: #{tpu_custom_call.1} parent=1 // pred_check
      _
    $region23: #{tpu_custom_call.1} parent=1 // pred_check_branch
      %65 = sbr.rel (0) target = $region25
    $region24: #{tpu_custom_call.1} parent=1 // pred_region
      %66 = dma.done [#allocation3], 256
    $region25: #{tpu_custom_call.1} parent=1 // pred_fallthru
      _
    // Predicated region
    $region26: #{tpu_custom_call.1} parent=1 // pred_check
      _
    $region27: #{tpu_custom_call.1} parent=1 // pred_check_branch
      %68 = sbr.rel (0) target = $region29
    $region28: #{tpu_custom_call.1} parent=1 // pred_region
      %69 = dma.done [#allocation6], 512
    $region29: #{tpu_custom_call.1} parent=1 // pred_fallthru
      _
    // Predicated region
    $region30: #{tpu_custom_call.1} parent=1 // pred_check
      _
    $region31: #{tpu_custom_call.1} parent=1 // pred_check_branch
      %71 = sbr.rel (0) target = $region33
    $region32: #{tpu_custom_call.1} parent=1 // pred_region
      %72 = dma.done [#allocation6], 512
    $region33: #{tpu_custom_call.1} parent=1 // pred_fallthru
      _
    // Predicated region
    $region34: #{tpu_custom_call.1} parent=1 // pred_check
      _
    $region35: #{tpu_custom_call.1} parent=1 // pred_check_branch
      %74 = sbr.rel (0) target = $region37
    $region36: #{tpu_custom_call.1} parent=1 // pred_region
      %75 = dma.done [#allocation9], 512
    $region37: #{tpu_custom_call.1} parent=1 // pred_fallthru
      _
    %v76 = vld [vmem:[#allocation8] sm:$0xff]
    %v77 = vld [vmem:[#allocation8 + $0x8] sm:$0xff]
    %v78 = vld [vmem:[#allocation8 + $0x10] sm:$0xff]
    %v79 = vld [vmem:[#allocation8 + $0x18] sm:$0xff]
    %v80 = vld [vmem:[%s4] sm:$0x1]
    %v81 = vld [vmem:[#allocation2] sm:$0xff]
    %v82 = vld [vmem:[#allocation2 + $0x8] sm:$0xff]
    %v84 = vlaneseq
    %v85 = vshrl.u32 %v84, 7
    %v86 = vsub.s32 0, %v85
    %v87 = vrot.slane %v80, %v86
    %vm89 = vcmask 261120
    %v91 = vsel %vm89, %v81, 0
    %v94 = vsel %vm89, %v82, 0
    %96 = vmatprep.subr.mxu0 0.0
    %97 = vmatpush1.msra.mxu0 %v76
    %98 = vmatprep.subr.mxu0 0.0
    %99 = vmatpush1.msra.mxu0 %v77
    %100 = vmatprep.subr.mxu0 0.0
    %101 = vmatpush1.msra.mxu0 %v78
    %102 = vmatprep.subr.mxu0 0.0
    %103 = vmatpush1.msra.mxu0 %v79
    %104 = vmatprep.subr.mxu0 0.0
    %105 = vmatpush1.msra.mxu0 0.0
    %106 = vmatprep.subr.mxu0 0.0
    %107 = vmatpush1.msra.mxu0 0.0
    %108 = vmatprep.subr.mxu0 0.0
    %109 = vmatpush1.msra.mxu0 0.0
    %110 = vmatprep.subr.mxu0 0.0
    %111 = vmatpush1.msra.mxu0 0.0
    %112 = vmatprep.subr.mxu0 0.0
    %113 = vmatpush1.msra.mxu0 0.0
    %114 = vmatprep.subr.mxu0 0.0
    %115 = vmatpush1.msra.mxu0 0.0
    %116 = vmatprep.subr.mxu0 0.0
    %117 = vmatpush1.msra.mxu0 0.0
    %118 = vmatprep.subr.mxu0 0.0
    %119 = vmatpush1.msra.mxu0 0.0
    %120 = vmatprep.subr.mxu0 0.0
    %121 = vmatpush1.msra.mxu0 0.0
    %122 = vmatprep.subr.mxu0 0.0
    %123 = vmatpush1.msra.mxu0 0.0
    %124 = vmatprep.subr.mxu0 0.0
    %125 = vmatpush1.msra.mxu0 0.0
    %126 = vmatprep.subr.mxu0 0.0
    %127 = vmatpush1.msra.mxu0 0.0
    %128 = vmatprep.subr.mxu0 0.0
    %129 = vmatpush1.msra.mxu0 0.0
    %130 = vmatprep.subr.mxu0 0.0
    %131 = vmatpush1.msra.mxu0 0.0
    %132 = vmatprep.subr.mxu0 0.0
    %133 = vmatpush1.msra.mxu0 0.0
    %134 = vmatprep.subr.mxu0 0.0
    %135 = vmatpush1.msra.mxu0 0.0
    %136 = vmatprep.subr.mxu0 0.0
    %137 = vmatpush1.msra.mxu0 0.0
    %138 = vmatprep.subr.mxu0 0.0
    %139 = vmatpush1.msra.mxu0 0.0
    %140 = vmatprep.subr.mxu0 0.0
    %141 = vmatpush1.msra.mxu0 0.0
    %142 = vmatprep.subr.mxu0 0.0
    %143 = vmatpush1.msra.mxu0 0.0
    %144 = vmatprep.subr.mxu0 0.0
    %145 = vmatpush1.msra.mxu0 0.0
    %146 = vmatprep.subr.mxu0 0.0
    %147 = vmatpush1.msra.mxu0 0.0
    %148 = vmatprep.subr.mxu0 0.0
    %149 = vmatpush1.msra.mxu0 0.0
    %150 = vmatprep.subr.mxu0 0.0
    %151 = vmatpush1.msra.mxu0 0.0
    %152 = vmatprep.subr.mxu0 0.0
    %153 = vmatpush1.msra.mxu0 0.0
    %154 = vmatprep.subr.mxu0 0.0
    %155 = vmatpush1.msra.mxu0 0.0
    %156 = vmatprep.subr.mxu0 0.0
    %157 = vmatpush1.msra.mxu0 0.0
    %158 = vmatprep.subr.mxu0 0.0
    %159 = vmatpush1.msra.mxu0 0.0
    %160 = vmatprep.mubr.f32.mxu0 0.0
    %161 = vmatmul.mubr.f32.gmra.mrb[0].mxu0 %v91
    %v162 = vpop.f32.mrb[0].mxu0
    %v163 = vadd.f32 %v87, %v162
    %v164 = vpop.f32.mrb[0].mxu0
    %165 = vmatprep.mubr.f32.mxu0 0.0
    %166 = vmatmul.mubr.f32.gmra.mrb[0].mxu0 %v94
    %v167 = vpop.f32.mrb[0].mxu0
    %v168 = vadd.f32 %v87, %v167
    %v169 = vpop.f32.mrb[0].mxu0
    %170 = vdwg.mxu0
    %v171 = vld [vmem:[#allocation5] sm:$0xff]
    %v172 = vld [vmem:[#allocation5 + $0x8] sm:$0xff]
    %v173 = vld [vmem:[#allocation5 + $0x10] sm:$0xff]
    %v174 = vld [vmem:[#allocation5 + $0x18] sm:$0xff]
    %179 = vrot.lane.b32.xlu0 %v76, 96
    %v180 = vpop.permute.xlu0 %179
    %181 = vrot.lane.b32.xlu0 %v77, 96
    %v182 = vpop.permute.xlu0 %181
    %183 = vrot.lane.b32.xlu0 %v78, 96
    %v184 = vpop.permute.xlu0 %183
    %185 = vrot.lane.b32.xlu0 %v79, 96
    %v186 = vpop.permute.xlu0 %185
    %191 = vrot.lane.b32.xlu0 %v87, 96
    %v192 = vpop.permute.xlu0 %191
    %v195 = vsel %vm89, %v171, 0
    %v198 = vsel %vm89, %v172, 0
    %v201 = vsel %vm89, %v173, 0
    %v204 = vsel %vm89, %v174, 0
    %206 = vmatprep.subr.mxu0 0.0
    %207 = vmatpush1.msra.mxu0 %v180
    %208 = vmatprep.subr.mxu0 0.0
    %209 = vmatpush1.msra.mxu0 %v182
    %210 = vmatprep.subr.mxu0 0.0
    %211 = vmatpush1.msra.mxu0 %v184
    %212 = vmatprep.subr.mxu0 0.0
    %213 = vmatpush1.msra.mxu0 %v186
    %214 = vmatprep.subr.mxu0 0.0
    %215 = vmatpush1.msra.mxu0 0.0
    %216 = vmatprep.subr.mxu0 0.0
    %217 = vmatpush1.msra.mxu0 0.0
    %218 = vmatprep.subr.mxu0 0.0
    %219 = vmatpush1.msra.mxu0 0.0
    %220 = vmatprep.subr.mxu0 0.0
    %221 = vmatpush1.msra.mxu0 0.0
    %222 = vmatprep.subr.mxu0 0.0
    %223 = vmatpush1.msra.mxu0 0.0
    %224 = vmatprep.subr.mxu0 0.0
    %225 = vmatpush1.msra.mxu0 0.0
    %226 = vmatprep.subr.mxu0 0.0
    %227 = vmatpush1.msra.mxu0 0.0
    %228 = vmatprep.subr.mxu0 0.0
    %229 = vmatpush1.msra.mxu0 0.0
    %230 = vmatprep.subr.mxu0 0.0
    %231 = vmatpush1.msra.mxu0 0.0
    %232 = vmatprep.subr.mxu0 0.0
    %233 = vmatpush1.msra.mxu0 0.0
    %234 = vmatprep.subr.mxu0 0.0
    %235 = vmatpush1.msra.mxu0 0.0
    %236 = vmatprep.subr.mxu0 0.0
    %237 = vmatpush1.msra.mxu0 0.0
    %238 = vmatprep.subr.mxu0 0.0
    %239 = vmatpush1.msra.mxu0 0.0
    %240 = vmatprep.subr.mxu0 0.0
    %241 = vmatpush1.msra.mxu0 0.0
    %242 = vmatprep.subr.mxu0 0.0
    %243 = vmatpush1.msra.mxu0 0.0
    %244 = vmatprep.subr.mxu0 0.0
    %245 = vmatpush1.msra.mxu0 0.0
    %246 = vmatprep.subr.mxu0 0.0
    %247 = vmatpush1.msra.mxu0 0.0
    %248 = vmatprep.subr.mxu0 0.0
    %249 = vmatpush1.msra.mxu0 0.0
    %250 = vmatprep.subr.mxu0 0.0
    %251 = vmatpush1.msra.mxu0 0.0
    %252 = vmatprep.subr.mxu0 0.0
    %253 = vmatpush1.msra.mxu0 0.0
    %254 = vmatprep.subr.mxu0 0.0
    %255 = vmatpush1.msra.mxu0 0.0
    %256 = vmatprep.subr.mxu0 0.0
    %257 = vmatpush1.msra.mxu0 0.0
    %258 = vmatprep.subr.mxu0 0.0
    %259 = vmatpush1.msra.mxu0 0.0
    %260 = vmatprep.subr.mxu0 0.0
    %261 = vmatpush1.msra.mxu0 0.0
    %262 = vmatprep.subr.mxu0 0.0
    %263 = vmatpush1.msra.mxu0 0.0
    %264 = vmatprep.subr.mxu0 0.0
    %265 = vmatpush1.msra.mxu0 0.0
    %266 = vmatprep.subr.mxu0 0.0
    %267 = vmatpush1.msra.mxu0 0.0
    %268 = vmatprep.subr.mxu0 0.0
    %269 = vmatpush1.msra.mxu0 0.0
    %270 = vmatprep.mubr.f32.mxu0 0.0
    %271 = vmatmul.mubr.f32.gmra.mrb[0].mxu0 %v195
    %v272 = vpop.f32.mrb[0].mxu0
    %v273 = vadd.f32 %v192, %v272
    %v274 = vpop.f32.mrb[0].mxu0
    %275 = vmatprep.mubr.f32.mxu0 0.0
    %276 = vmatmul.mubr.f32.gmra.mrb[0].mxu0 %v198
    %v277 = vpop.f32.mrb[0].mxu0
    %v278 = vadd.f32 %v192, %v277
    %v279 = vpop.f32.mrb[0].mxu0
    %280 = vmatprep.mubr.f32.mxu0 0.0
    %281 = vmatmul.mubr.f32.gmra.mrb[0].mxu0 %v201
    %v282 = vpop.f32.mrb[0].mxu0
    %v283 = vadd.f32 %v192, %v282
    %v284 = vpop.f32.mrb[0].mxu0
    %285 = vmatprep.mubr.f32.mxu0 0.0
    %286 = vmatmul.mubr.f32.gmra.mrb[0].mxu0 %v204
    %v287 = vpop.f32.mrb[0].mxu0
    %v288 = vadd.f32 %v192, %v287
    %v289 = vpop.f32.mrb[0].mxu0
    %290 = vdwg.mxu0
    %v291 = vld [vmem:[#allocation7] sm:$0xff]
    %v292 = vld [vmem:[#allocation7 + $0x8] sm:$0xff]
    %v293 = vld [vmem:[#allocation7 + $0x10] sm:$0xff]
    %v294 = vld [vmem:[#allocation7 + $0x18] sm:$0xff]
    %295 = vrot.lane.b32.xlu0 %v76, 64
    %v296 = vpop.permute.xlu0 %295
    %297 = vrot.lane.b32.xlu0 %v77, 64
    %v298 = vpop.permute.xlu0 %297
    %299 = vrot.lane.b32.xlu0 %v78, 64
    %v300 = vpop.permute.xlu0 %299
    %301 = vrot.lane.b32.xlu0 %v79, 64
    %v302 = vpop.permute.xlu0 %301
    %307 = vrot.lane.b32.xlu0 %v87, 64
    %v308 = vpop.permute.xlu0 %307
    %v311 = vsel %vm89, %v291, 0
    %v314 = vsel %vm89, %v292, 0
    %v317 = vsel %vm89, %v293, 0
    %v320 = vsel %vm89, %v294, 0
    %322 = vmatprep.subr.mxu0 0.0
    %323 = vmatpush1.msra.mxu0 %v296
    %324 = vmatprep.subr.mxu0 0.0
    %325 = vmatpush1.msra.mxu0 %v298
    %326 = vmatprep.subr.mxu0 0.0
    %327 = vmatpush1.msra.mxu0 %v300
    %328 = vmatprep.subr.mxu0 0.0
    %329 = vmatpush1.msra.mxu0 %v302
    %330 = vmatprep.subr.mxu0 0.0
    %331 = vmatpush1.msra.mxu0 0.0
    %332 = vmatprep.subr.mxu0 0.0
    %333 = vmatpush1.msra.mxu0 0.0
    %334 = vmatprep.subr.mxu0 0.0
    %335 = vmatpush1.msra.mxu0 0.0
    %336 = vmatprep.subr.mxu0 0.0
    %337 = vmatpush1.msra.mxu0 0.0
    %338 = vmatprep.subr.mxu0 0.0
    %339 = vmatpush1.msra.mxu0 0.0
    %340 = vmatprep.subr.mxu0 0.0
    %341 = vmatpush1.msra.mxu0 0.0
    %342 = vmatprep.subr.mxu0 0.0
    %343 = vmatpush1.msra.mxu0 0.0
    %344 = vmatprep.subr.mxu0 0.0
    %345 = vmatpush1.msra.mxu0 0.0
    %346 = vmatprep.subr.mxu0 0.0
    %347 = vmatpush1.msra.mxu0 0.0
    %348 = vmatprep.subr.mxu0 0.0
    %349 = vmatpush1.msra.mxu0 0.0
    %350 = vmatprep.subr.mxu0 0.0
    %351 = vmatpush1.msra.mxu0 0.0
    %352 = vmatprep.subr.mxu0 0.0
    %353 = vmatpush1.msra.mxu0 0.0
    %354 = vmatprep.subr.mxu0 0.0
    %355 = vmatpush1.msra.mxu0 0.0
    %356 = vmatprep.subr.mxu0 0.0
    %357 = vmatpush1.msra.mxu0 0.0
    %358 = vmatprep.subr.mxu0 0.0
    %359 = vmatpush1.msra.mxu0 0.0
    %360 = vmatprep.subr.mxu0 0.0
    %361 = vmatpush1.msra.mxu0 0.0
    %362 = vmatprep.subr.mxu0 0.0
    %363 = vmatpush1.msra.mxu0 0.0
    %364 = vmatprep.subr.mxu0 0.0
    %365 = vmatpush1.msra.mxu0 0.0
    %366 = vmatprep.subr.mxu0 0.0
    %367 = vmatpush1.msra.mxu0 0.0
    %368 = vmatprep.subr.mxu0 0.0
    %369 = vmatpush1.msra.mxu0 0.0
    %370 = vmatprep.subr.mxu0 0.0
    %371 = vmatpush1.msra.mxu0 0.0
    %372 = vmatprep.subr.mxu0 0.0
    %373 = vmatpush1.msra.mxu0 0.0
    %374 = vmatprep.subr.mxu0 0.0
    %375 = vmatpush1.msra.mxu0 0.0
    %376 = vmatprep.subr.mxu0 0.0
    %377 = vmatpush1.msra.mxu0 0.0
    %378 = vmatprep.subr.mxu0 0.0
    %379 = vmatpush1.msra.mxu0 0.0
    %380 = vmatprep.subr.mxu0 0.0
    %381 = vmatpush1.msra.mxu0 0.0
    %382 = vmatprep.subr.mxu0 0.0
    %383 = vmatpush1.msra.mxu0 0.0
    %384 = vmatprep.subr.mxu0 0.0
    %385 = vmatpush1.msra.mxu0 0.0
    %386 = vmatprep.mubr.f32.mxu0 0.0
    %387 = vmatmul.mubr.f32.gmra.mrb[0].mxu0 %v311
    %v388 = vpop.f32.mrb[0].mxu0
    %v389 = vadd.f32 %v308, %v388
    %v390 = vpop.f32.mrb[0].mxu0
    %391 = vmatprep.mubr.f32.mxu0 0.0
    %392 = vmatmul.mubr.f32.gmra.mrb[0].mxu0 %v314
    %v393 = vpop.f32.mrb[0].mxu0
    %v394 = vadd.f32 %v308, %v393
    %v395 = vpop.f32.mrb[0].mxu0
    %396 = vmatprep.mubr.f32.mxu0 0.0
    %397 = vmatmul.mubr.f32.gmra.mrb[0].mxu0 %v317
    %v398 = vpop.f32.mrb[0].mxu0
    %v399 = vadd.f32 %v308, %v398
    %v400 = vpop.f32.mrb[0].mxu0
    %401 = vmatprep.mubr.f32.mxu0 0.0
    %402 = vmatmul.mubr.f32.gmra.mrb[0].mxu0 %v320
    %v403 = vpop.f32.mrb[0].mxu0
    %v404 = vadd.f32 %v308, %v403
    %v405 = vpop.f32.mrb[0].mxu0
    %406 = vdwg.mxu0
    %vm407 = vcmask 64512
    %v409 = vsel %vm407, %v163, 0
    %v412 = vsel %vm407, %v273, 0
    %v415 = vsel %vm407, %v278, 0
    %417 = vmatprep.subr.mxu0 0.0
    %418 = vmatpush1.xpose.msra.mxu0 %v412
    %419 = vmatprep.subr.mxu0 0.0
    %420 = vmatpush1.xpose.msra.mxu0 %v415
    %421 = vmatprep.subr.mxu0 0.0
    %422 = vmatpush1.xpose.msra.mxu0 0.0
    %423 = vmatprep.subr.mxu0 0.0
    %424 = vmatpush1.xpose.msra.mxu0 0.0
    %425 = vmatprep.subr.mxu0 0.0
    %426 = vmatpush1.xpose.msra.mxu0 0.0
    %427 = vmatprep.subr.mxu0 0.0
    %428 = vmatpush1.xpose.msra.mxu0 0.0
    %429 = vmatprep.subr.mxu0 0.0
    %430 = vmatpush1.xpose.msra.mxu0 0.0
    %431 = vmatprep.subr.mxu0 0.0
    %432 = vmatpush1.xpose.msra.mxu0 0.0
    %433 = vmatprep.subr.mxu0 0.0
    %434 = vmatpush1.xpose.msra.mxu0 0.0
    %435 = vmatprep.subr.mxu0 0.0
    %436 = vmatpush1.xpose.msra.mxu0 0.0
    %437 = vmatprep.subr.mxu0 0.0
    %438 = vmatpush1.xpose.msra.mxu0 0.0
    %439 = vmatprep.subr.mxu0 0.0
    %440 = vmatpush1.xpose.msra.mxu0 0.0
    %441 = vmatprep.subr.mxu0 0.0
    %442 = vmatpush1.xpose.msra.mxu0 0.0
    %443 = vmatprep.subr.mxu0 0.0
    %444 = vmatpush1.xpose.msra.mxu0 0.0
    %445 = vmatprep.subr.mxu0 0.0
    %446 = vmatpush1.xpose.msra.mxu0 0.0
    %447 = vmatprep.subr.mxu0 0.0
    %448 = vmatpush1.xpose.msra.mxu0 0.0
    %449 = vmatprep.subr.mxu0 0.0
    %450 = vmatpush1.xpose.msra.mxu0 0.0
    %451 = vmatprep.subr.mxu0 0.0
    %452 = vmatpush1.xpose.msra.mxu0 0.0
    %453 = vmatprep.subr.mxu0 0.0
    %454 = vmatpush1.xpose.msra.mxu0 0.0
    %455 = vmatprep.subr.mxu0 0.0
    %456 = vmatpush1.xpose.msra.mxu0 0.0
    %457 = vmatprep.subr.mxu0 0.0
    %458 = vmatpush1.xpose.msra.mxu0 0.0
    %459 = vmatprep.subr.mxu0 0.0
    %460 = vmatpush1.xpose.msra.mxu0 0.0
    %461 = vmatprep.subr.mxu0 0.0
    %462 = vmatpush1.xpose.msra.mxu0 0.0
    %463 = vmatprep.subr.mxu0 0.0
    %464 = vmatpush1.xpose.msra.mxu0 0.0
    %465 = vmatprep.subr.mxu0 0.0
    %466 = vmatpush1.xpose.msra.mxu0 0.0
    %467 = vmatprep.subr.mxu0 0.0
    %468 = vmatpush1.xpose.msra.mxu0 0.0
    %469 = vmatprep.subr.mxu0 0.0
    %470 = vmatpush1.xpose.msra.mxu0 0.0
    %471 = vmatprep.subr.mxu0 0.0
    %472 = vmatpush1.xpose.msra.mxu0 0.0
    %473 = vmatprep.subr.mxu0 0.0
    %474 = vmatpush1.xpose.msra.mxu0 0.0
    %475 = vmatprep.subr.mxu0 0.0
    %476 = vmatpush1.xpose.msra.mxu0 0.0
    %477 = vmatprep.subr.mxu0 0.0
    %478 = vmatpush1.xpose.msra.mxu0 0.0
    %479 = vmatprep.subr.mxu0 0.0
    %480 = vmatpush1.xpose.msra.mxu0 0.0
    %481 = vmatprep.mubr.f32.mxu0 0.0
    %482 = vmatmul.mubr.f32.gmra.mrb[0].mxu0 %v409
    %v483 = vpop.f32.mrb[0].mxu0
    %v484 = vadd.f32 0.0, %v483
    %v485 = vpop.f32.mrb[0].mxu0
    %486 = vdwg.mxu0
    %vm487 = vcmask 130048
    %v488 = vsel %vm487, %v484, -inf
    %489 = vmax.xlane.f32.xlu0 %v488
    %v490 = vpop.xlane.xlu0 %489
    %v491 = vsub.f32 %v484, %v490
    %v492 = vmul.f32 %v491, 1.442695
    %v493 = vpow.pop %v492
    %v494 = vsel %vm487, %v493, 0.0
    %495 = vadd.xlane.f32.xlu0 %v494
    %v496 = vpop.xlane.xlu0 %495
    %v497 = vrcp.pop %v496
    %v498 = vmul.f32 %v493, %v497
    %v500 = vsel %vm487, %v498, 0
    %502 = vmatprep.subr.mxu0 0.0
    %503 = vmatpush1.msra.mxu0 %v389
    %504 = vmatprep.subr.mxu0 0.0
    %505 = vmatpush1.msra.mxu0 %v394
    %506 = vmatprep.subr.mxu0 0.0
    %507 = vmatpush1.msra.mxu0 0.0
    %508 = vmatprep.subr.mxu0 0.0
    %509 = vmatpush1.msra.mxu0 0.0
    %510 = vmatprep.subr.mxu0 0.0
    %511 = vmatpush1.msra.mxu0 0.0
    %512 = vmatprep.subr.mxu0 0.0
    %513 = vmatpush1.msra.mxu0 0.0
    %514 = vmatprep.subr.mxu0 0.0
    %515 = vmatpush1.msra.mxu0 0.0
    %516 = vmatprep.subr.mxu0 0.0
    %517 = vmatpush1.msra.mxu0 0.0
    %518 = vmatprep.subr.mxu0 0.0
    %519 = vmatpush1.msra.mxu0 0.0
    %520 = vmatprep.subr.mxu0 0.0
    %521 = vmatpush1.msra.mxu0 0.0
    %522 = vmatprep.subr.mxu0 0.0
    %523 = vmatpush1.msra.mxu0 0.0
    %524 = vmatprep.subr.mxu0 0.0
    %525 = vmatpush1.msra.mxu0 0.0
    %526 = vmatprep.subr.mxu0 0.0
    %527 = vmatpush1.msra.mxu0 0.0
    %528 = vmatprep.subr.mxu0 0.0
    %529 = vmatpush1.msra.mxu0 0.0
    %530 = vmatprep.subr.mxu0 0.0
    %531 = vmatpush1.msra.mxu0 0.0
    %532 = vmatprep.subr.mxu0 0.0
    %533 = vmatpush1.msra.mxu0 0.0
    %534 = vmatprep.subr.mxu0 0.0
    %535 = vmatpush1.msra.mxu0 0.0
    %536 = vmatprep.subr.mxu0 0.0
    %537 = vmatpush1.msra.mxu0 0.0
    %538 = vmatprep.subr.mxu0 0.0
    %539 = vmatpush1.msra.mxu0 0.0
    %540 = vmatprep.subr.mxu0 0.0
    %541 = vmatpush1.msra.mxu0 0.0
    %542 = vmatprep.subr.mxu0 0.0
    %543 = vmatpush1.msra.mxu0 0.0
    %544 = vmatprep.subr.mxu0 0.0
    %545 = vmatpush1.msra.mxu0 0.0
    %546 = vmatprep.subr.mxu0 0.0
    %547 = vmatpush1.msra.mxu0 0.0
    %548 = vmatprep.subr.mxu0 0.0
    %549 = vmatpush1.msra.mxu0 0.0
    %550 = vmatprep.subr.mxu0 0.0
    %551 = vmatpush1.msra.mxu0 0.0
    %552 = vmatprep.subr.mxu0 0.0
    %553 = vmatpush1.msra.mxu0 0.0
    %554 = vmatprep.subr.mxu0 0.0
    %555 = vmatpush1.msra.mxu0 0.0
    %556 = vmatprep.subr.mxu0 0.0
    %557 = vmatpush1.msra.mxu0 0.0
    %558 = vmatprep.subr.mxu0 0.0
    %559 = vmatpush1.msra.mxu0 0.0
    %560 = vmatprep.subr.mxu0 0.0
    %561 = vmatpush1.msra.mxu0 0.0
    %562 = vmatprep.subr.mxu0 0.0
    %563 = vmatpush1.msra.mxu0 0.0
    %564 = vmatprep.subr.mxu0 0.0
    %565 = vmatpush1.msra.mxu0 0.0
    %566 = vmatprep.mubr.f32.mxu0 0.0
    %567 = vmatmul.mubr.f32.gmra.mrb[0].mxu0 %v500
    %v568 = vpop.f32.mrb[0].mxu0
    %v569 = vadd.f32 0.0, %v568
    %v570 = vpop.f32.mrb[0].mxu0
    %571 = vdwg.mxu0
    %v573 = vsel %vm407, %v168, 0
    %v576 = vsel %vm407, %v283, 0
    %v579 = vsel %vm407, %v288, 0
    %581 = vmatprep.subr.mxu0 0.0
    %582 = vmatpush1.xpose.msra.mxu0 %v576
    %583 = vmatprep.subr.mxu0 0.0
    %584 = vmatpush1.xpose.msra.mxu0 %v579
    %585 = vmatprep.subr.mxu0 0.0
    %586 = vmatpush1.xpose.msra.mxu0 0.0
    %587 = vmatprep.subr.mxu0 0.0
    %588 = vmatpush1.xpose.msra.mxu0 0.0
    %589 = vmatprep.subr.mxu0 0.0
    %590 = vmatpush1.xpose.msra.mxu0 0.0
    %591 = vmatprep.subr.mxu0 0.0
    %592 = vmatpush1.xpose.msra.mxu0 0.0
    %593 = vmatprep.subr.mxu0 0.0
    %594 = vmatpush1.xpose.msra.mxu0 0.0
    %595 = vmatprep.subr.mxu0 0.0
    %596 = vmatpush1.xpose.msra.mxu0 0.0
    %597 = vmatprep.subr.mxu0 0.0
    %598 = vmatpush1.xpose.msra.mxu0 0.0
    %599 = vmatprep.subr.mxu0 0.0
    %600 = vmatpush1.xpose.msra.mxu0 0.0
    %601 = vmatprep.subr.mxu0 0.0
    %602 = vmatpush1.xpose.msra.mxu0 0.0
    %603 = vmatprep.subr.mxu0 0.0
    %604 = vmatpush1.xpose.msra.mxu0 0.0
    %605 = vmatprep.subr.mxu0 0.0
    %606 = vmatpush1.xpose.msra.mxu0 0.0
    %607 = vmatprep.subr.mxu0 0.0
    %608 = vmatpush1.xpose.msra.mxu0 0.0
    %609 = vmatprep.subr.mxu0 0.0
    %610 = vmatpush1.xpose.msra.mxu0 0.0
    %611 = vmatprep.subr.mxu0 0.0
    %612 = vmatpush1.xpose.msra.mxu0 0.0
    %613 = vmatprep.subr.mxu0 0.0
    %614 = vmatpush1.xpose.msra.mxu0 0.0
    %615 = vmatprep.subr.mxu0 0.0
    %616 = vmatpush1.xpose.msra.mxu0 0.0
    %617 = vmatprep.subr.mxu0 0.0
    %618 = vmatpush1.xpose.msra.mxu0 0.0
    %619 = vmatprep.subr.mxu0 0.0
    %620 = vmatpush1.xpose.msra.mxu0 0.0
    %621 = vmatprep.subr.mxu0 0.0
    %622 = vmatpush1.xpose.msra.mxu0 0.0
    %623 = vmatprep.subr.mxu0 0.0
    %624 = vmatpush1.xpose.msra.mxu0 0.0
    %625 = vmatprep.subr.mxu0 0.0
    %626 = vmatpush1.xpose.msra.mxu0 0.0
    %627 = vmatprep.subr.mxu0 0.0
    %628 = vmatpush1.xpose.msra.mxu0 0.0
    %629 = vmatprep.subr.mxu0 0.0
    %630 = vmatpush1.xpose.msra.mxu0 0.0
    %631 = vmatprep.subr.mxu0 0.0
    %632 = vmatpush1.xpose.msra.mxu0 0.0
    %633 = vmatprep.subr.mxu0 0.0
    %634 = vmatpush1.xpose.msra.mxu0 0.0
    %635 = vmatprep.subr.mxu0 0.0
    %636 = vmatpush1.xpose.msra.mxu0 0.0
    %637 = vmatprep.subr.mxu0 0.0
    %638 = vmatpush1.xpose.msra.mxu0 0.0
    %639 = vmatprep.subr.mxu0 0.0
    %640 = vmatpush1.xpose.msra.mxu0 0.0
    %641 = vmatprep.subr.mxu0 0.0
    %642 = vmatpush1.xpose.msra.mxu0 0.0
    %643 = vmatprep.subr.mxu0 0.0
    %644 = vmatpush1.xpose.msra.mxu0 0.0
    %645 = vmatprep.mubr.f32.mxu0 0.0
    %646 = vmatmul.mubr.f32.gmra.mrb[0].mxu0 %v573
    %v647 = vpop.f32.mrb[0].mxu0
    %v648 = vadd.f32 0.0, %v647
    %v649 = vpop.f32.mrb[0].mxu0
    %650 = vdwg.mxu0
    %v651 = vsel %vm487, %v648, -inf
    %652 = vmax.xlane.f32.xlu0 %v651
    %v653 = vpop.xlane.xlu0 %652
    %v654 = vsub.f32 %v648, %v653
    %v655 = vmul.f32 %v654, 1.442695
    %v656 = vpow.pop %v655
    %v657 = vsel %vm487, %v656, 0.0
    %658 = vadd.xlane.f32.xlu0 %v657
    %v659 = vpop.xlane.xlu0 %658
    %v660 = vrcp.pop %v659
    %v661 = vmul.f32 %v656, %v660
    %v663 = vsel %vm487, %v661, 0
    %665 = vmatprep.subr.mxu0 0.0
    %666 = vmatpush1.msra.mxu0 %v399
    %667 = vmatprep.subr.mxu0 0.0
    %668 = vmatpush1.msra.mxu0 %v404
    %669 = vmatprep.subr.mxu0 0.0
    %670 = vmatpush1.msra.mxu0 0.0
    %671 = vmatprep.subr.mxu0 0.0
    %672 = vmatpush1.msra.mxu0 0.0
    %673 = vmatprep.subr.mxu0 0.0
    %674 = vmatpush1.msra.mxu0 0.0
    %675 = vmatprep.subr.mxu0 0.0
    %676 = vmatpush1.msra.mxu0 0.0
    %677 = vmatprep.subr.mxu0 0.0
    %678 = vmatpush1.msra.mxu0 0.0
    %679 = vmatprep.subr.mxu0 0.0
    %680 = vmatpush1.msra.mxu0 0.0
    %681 = vmatprep.subr.mxu0 0.0
    %682 = vmatpush1.msra.mxu0 0.0
    %683 = vmatprep.subr.mxu0 0.0
    %684 = vmatpush1.msra.mxu0 0.0
    %685 = vmatprep.subr.mxu0 0.0
    %686 = vmatpush1.msra.mxu0 0.0
    %687 = vmatprep.subr.mxu0 0.0
    %688 = vmatpush1.msra.mxu0 0.0
    %689 = vmatprep.subr.mxu0 0.0
    %690 = vmatpush1.msra.mxu0 0.0
    %691 = vmatprep.subr.mxu0 0.0
    %692 = vmatpush1.msra.mxu0 0.0
    %693 = vmatprep.subr.mxu0 0.0
    %694 = vmatpush1.msra.mxu0 0.0
    %695 = vmatprep.subr.mxu0 0.0
    %696 = vmatpush1.msra.mxu0 0.0
    %697 = vmatprep.subr.mxu0 0.0
    %698 = vmatpush1.msra.mxu0 0.0
    %699 = vmatprep.subr.mxu0 0.0
    %700 = vmatpush1.msra.mxu0 0.0
    %701 = vmatprep.subr.mxu0 0.0
    %702 = vmatpush1.msra.mxu0 0.0
    %703 = vmatprep.subr.mxu0 0.0
    %704 = vmatpush1.msra.mxu0 0.0
    %705 = vmatprep.subr.mxu0 0.0
    %706 = vmatpush1.msra.mxu0 0.0
    %707 = vmatprep.subr.mxu0 0.0
    %708 = vmatpush1.msra.mxu0 0.0
    %709 = vmatprep.subr.mxu0 0.0
    %710 = vmatpush1.msra.mxu0 0.0
    %711 = vmatprep.subr.mxu0 0.0
    %712 = vmatpush1.msra.mxu0 0.0
    %713 = vmatprep.subr.mxu0 0.0
    %714 = vmatpush1.msra.mxu0 0.0
    %715 = vmatprep.subr.mxu0 0.0
    %716 = vmatpush1.msra.mxu0 0.0
    %717 = vmatprep.subr.mxu0 0.0
    %718 = vmatpush1.msra.mxu0 0.0
    %719 = vmatprep.subr.mxu0 0.0
    %720 = vmatpush1.msra.mxu0 0.0
    %721 = vmatprep.subr.mxu0 0.0
    %722 = vmatpush1.msra.mxu0 0.0
    %723 = vmatprep.subr.mxu0 0.0
    %724 = vmatpush1.msra.mxu0 0.0
    %725 = vmatprep.subr.mxu0 0.0
    %726 = vmatpush1.msra.mxu0 0.0
    %727 = vmatprep.subr.mxu0 0.0
    %728 = vmatpush1.msra.mxu0 0.0
    %729 = vmatprep.mubr.f32.mxu0 0.0
    %730 = vmatmul.mubr.f32.gmra.mrb[0].mxu0 %v663
    %v731 = vpop.f32.mrb[0].mxu0
    %v732 = vadd.f32 0.0, %v731
    %v733 = vpop.f32.mrb[0].mxu0
    %734 = vdwg.mxu0
    %735 = vrot.lane.b32.xlu0 %v163, 120
    %v736 = vpop.permute.xlu0 %735
    %737 = vrot.lane.b32.xlu0 %v273, 120
    %v738 = vpop.permute.xlu0 %737
    %739 = vrot.lane.b32.xlu0 %v278, 120
    %v740 = vpop.permute.xlu0 %739
    %v741 = vsel %vm407, %v736, 0
    %v743 = vsel %vm407, %v738, 0
    %v745 = vsel %vm407, %v740, 0
    %747 = vmatprep.subr.mxu0 0.0
    %748 = vmatpush1.xpose.msra.mxu0 %v743
    %749 = vmatprep.subr.mxu0 0.0
    %750 = vmatpush1.xpose.msra.mxu0 %v745
    %751 = vmatprep.subr.mxu0 0.0
    %752 = vmatpush1.xpose.msra.mxu0 0.0
    %753 = vmatprep.subr.mxu0 0.0
    %754 = vmatpush1.xpose.msra.mxu0 0.0
    %755 = vmatprep.subr.mxu0 0.0
    %756 = vmatpush1.xpose.msra.mxu0 0.0
    %757 = vmatprep.subr.mxu0 0.0
    %758 = vmatpush1.xpose.msra.mxu0 0.0
    %759 = vmatprep.subr.mxu0 0.0
    %760 = vmatpush1.xpose.msra.mxu0 0.0
    %761 = vmatprep.subr.mxu0 0.0
    %762 = vmatpush1.xpose.msra.mxu0 0.0
    %763 = vmatprep.subr.mxu0 0.0
    %764 = vmatpush1.xpose.msra.mxu0 0.0
    %765 = vmatprep.subr.mxu0 0.0
    %766 = vmatpush1.xpose.msra.mxu0 0.0
    %767 = vmatprep.subr.mxu0 0.0
    %768 = vmatpush1.xpose.msra.mxu0 0.0
    %769 = vmatprep.subr.mxu0 0.0
    %770 = vmatpush1.xpose.msra.mxu0 0.0
    %771 = vmatprep.subr.mxu0 0.0
    %772 = vmatpush1.xpose.msra.mxu0 0.0
    %773 = vmatprep.subr.mxu0 0.0
    %774 = vmatpush1.xpose.msra.mxu0 0.0
    %775 = vmatprep.subr.mxu0 0.0
    %776 = vmatpush1.xpose.msra.mxu0 0.0
    %777 = vmatprep.subr.mxu0 0.0
    %778 = vmatpush1.xpose.msra.mxu0 0.0
    %779 = vmatprep.subr.mxu0 0.0
    %780 = vmatpush1.xpose.msra.mxu0 0.0
    %781 = vmatprep.subr.mxu0 0.0
    %782 = vmatpush1.xpose.msra.mxu0 0.0
    %783 = vmatprep.subr.mxu0 0.0
    %784 = vmatpush1.xpose.msra.mxu0 0.0
    %785 = vmatprep.subr.mxu0 0.0
    %786 = vmatpush1.xpose.msra.mxu0 0.0
    %787 = vmatprep.subr.mxu0 0.0
    %788 = vmatpush1.xpose.msra.mxu0 0.0
    %789 = vmatprep.subr.mxu0 0.0
    %790 = vmatpush1.xpose.msra.mxu0 0.0
    %791 = vmatprep.subr.mxu0 0.0
    %792 = vmatpush1.xpose.msra.mxu0 0.0
    %793 = vmatprep.subr.mxu0 0.0
    %794 = vmatpush1.xpose.msra.mxu0 0.0
    %795 = vmatprep.subr.mxu0 0.0
    %796 = vmatpush1.xpose.msra.mxu0 0.0
    %797 = vmatprep.subr.mxu0 0.0
    %798 = vmatpush1.xpose.msra.mxu0 0.0
    %799 = vmatprep.subr.mxu0 0.0
    %800 = vmatpush1.xpose.msra.mxu0 0.0
    %801 = vmatprep.subr.mxu0 0.0
    %802 = vmatpush1.xpose.msra.mxu0 0.0
    %803 = vmatprep.subr.mxu0 0.0
    %804 = vmatpush1.xpose.msra.mxu0 0.0
    %805 = vmatprep.subr.mxu0 0.0
    %806 = vmatpush1.xpose.msra.mxu0 0.0
    %807 = vmatprep.subr.mxu0 0.0
    %808 = vmatpush1.xpose.msra.mxu0 0.0
    %809 = vmatprep.subr.mxu0 0.0
    %810 = vmatpush1.xpose.msra.mxu0 0.0
    %811 = vmatprep.mubr.f32.mxu0 0.0
    %812 = vmatmul.mubr.f32.gmra.mrb[0].mxu0 %v741
    %v813 = vpop.f32.mrb[0].mxu0
    %v814 = vadd.f32 0.0, %v813
    %v815 = vpop.f32.mrb[0].mxu0
    %816 = vdwg.mxu0
    %v817 = vsel %vm487, %v814, -inf
    %818 = vmax.xlane.f32.xlu0 %v817
    %v819 = vpop.xlane.xlu0 %818
    %v820 = vsub.f32 %v814, %v819
    %v821 = vmul.f32 %v820, 1.442695
    %v822 = vpow.pop %v821
    %v823 = vsel %vm487, %v822, 0.0
    %824 = vadd.xlane.f32.xlu0 %v823
    %v825 = vpop.xlane.xlu0 %824
    %v826 = vrcp.pop %v825
    %v827 = vmul.f32 %v822, %v826
    %830 = vrot.lane.b32.xlu0 %v389, 120
    %v831 = vpop.permute.xlu0 %830
    %832 = vrot.lane.b32.xlu0 %v394, 120
    %v833 = vpop.permute.xlu0 %832
    %v837 = vsel %vm487, %v827, 0
    %839 = vmatprep.subr.mxu0 0.0
    %840 = vmatpush1.msra.mxu0 %v831
    %841 = vmatprep.subr.mxu0 0.0
    %842 = vmatpush1.msra.mxu0 %v833
    %843 = vmatprep.subr.mxu0 0.0
    %844 = vmatpush1.msra.mxu0 0.0
    %845 = vmatprep.subr.mxu0 0.0
    %846 = vmatpush1.msra.mxu0 0.0
    %847 = vmatprep.subr.mxu0 0.0
    %848 = vmatpush1.msra.mxu0 0.0
    %849 = vmatprep.subr.mxu0 0.0
    %850 = vmatpush1.msra.mxu0 0.0
    %851 = vmatprep.subr.mxu0 0.0
    %852 = vmatpush1.msra.mxu0 0.0
    %853 = vmatprep.subr.mxu0 0.0
    %854 = vmatpush1.msra.mxu0 0.0
    %855 = vmatprep.subr.mxu0 0.0
    %856 = vmatpush1.msra.mxu0 0.0
    %857 = vmatprep.subr.mxu0 0.0
    %858 = vmatpush1.msra.mxu0 0.0
    %859 = vmatprep.subr.mxu0 0.0
    %860 = vmatpush1.msra.mxu0 0.0
    %861 = vmatprep.subr.mxu0 0.0
    %862 = vmatpush1.msra.mxu0 0.0
    %863 = vmatprep.subr.mxu0 0.0
    %864 = vmatpush1.msra.mxu0 0.0
    %865 = vmatprep.subr.mxu0 0.0
    %866 = vmatpush1.msra.mxu0 0.0
    %867 = vmatprep.subr.mxu0 0.0
    %868 = vmatpush1.msra.mxu0 0.0
    %869 = vmatprep.subr.mxu0 0.0
    %870 = vmatpush1.msra.mxu0 0.0
    %871 = vmatprep.subr.mxu0 0.0
    %872 = vmatpush1.msra.mxu0 0.0
    %873 = vmatprep.subr.mxu0 0.0
    %874 = vmatpush1.msra.mxu0 0.0
    %875 = vmatprep.subr.mxu0 0.0
    %876 = vmatpush1.msra.mxu0 0.0
    %877 = vmatprep.subr.mxu0 0.0
    %878 = vmatpush1.msra.mxu0 0.0
    %879 = vmatprep.subr.mxu0 0.0
    %880 = vmatpush1.msra.mxu0 0.0
    %881 = vmatprep.subr.mxu0 0.0
    %882 = vmatpush1.msra.mxu0 0.0
    %883 = vmatprep.subr.mxu0 0.0
    %884 = vmatpush1.msra.mxu0 0.0
    %885 = vmatprep.subr.mxu0 0.0
    %886 = vmatpush1.msra.mxu0 0.0
    %887 = vmatprep.subr.mxu0 0.0
    %888 = vmatpush1.msra.mxu0 0.0
    %889 = vmatprep.subr.mxu0 0.0
    %890 = vmatpush1.msra.mxu0 0.0
    %891 = vmatprep.subr.mxu0 0.0
    %892 = vmatpush1.msra.mxu0 0.0
    %893 = vmatprep.subr.mxu0 0.0
    %894 = vmatpush1.msra.mxu0 0.0
    %895 = vmatprep.subr.mxu0 0.0
    %896 = vmatpush1.msra.mxu0 0.0
    %897 = vmatprep.subr.mxu0 0.0
    %898 = vmatpush1.msra.mxu0 0.0
    %899 = vmatprep.subr.mxu0 0.0
    %900 = vmatpush1.msra.mxu0 0.0
    %901 = vmatprep.subr.mxu0 0.0
    %902 = vmatpush1.msra.mxu0 0.0
    %903 = vmatprep.mubr.f32.mxu0 0.0
    %904 = vmatmul.mubr.f32.gmra.mrb[0].mxu0 %v837
    %v905 = vpop.f32.mrb[0].mxu0
    %v906 = vadd.f32 0.0, %v905
    %v907 = vpop.f32.mrb[0].mxu0
    %908 = vdwg.mxu0
    %909 = vrot.lane.b32.xlu0 %v168, 120
    %v910 = vpop.permute.xlu0 %909
    %911 = vrot.lane.b32.xlu0 %v283, 120
    %v912 = vpop.permute.xlu0 %911
    %913 = vrot.lane.b32.xlu0 %v288, 120
    %v914 = vpop.permute.xlu0 %913
    %v915 = vsel %vm407, %v910, 0
    %v917 = vsel %vm407, %v912, 0
    %v919 = vsel %vm407, %v914, 0
    %921 = vmatprep.subr.mxu0 0.0
    %922 = vmatpush1.xpose.msra.mxu0 %v917
    %923 = vmatprep.subr.mxu0 0.0
    %924 = vmatpush1.xpose.msra.mxu0 %v919
    %925 = vmatprep.subr.mxu0 0.0
    %926 = vmatpush1.xpose.msra.mxu0 0.0
    %927 = vmatprep.subr.mxu0 0.0
    %928 = vmatpush1.xpose.msra.mxu0 0.0
    %929 = vmatprep.subr.mxu0 0.0
    %930 = vmatpush1.xpose.msra.mxu0 0.0
    %931 = vmatprep.subr.mxu0 0.0
    %932 = vmatpush1.xpose.msra.mxu0 0.0
    %933 = vmatprep.subr.mxu0 0.0
    %934 = vmatpush1.xpose.msra.mxu0 0.0
    %935 = vmatprep.subr.mxu0 0.0
    %936 = vmatpush1.xpose.msra.mxu0 0.0
    %937 = vmatprep.subr.mxu0 0.0
    %938 = vmatpush1.xpose.msra.mxu0 0.0
    %939 = vmatprep.subr.mxu0 0.0
    %940 = vmatpush1.xpose.msra.mxu0 0.0
    %941 = vmatprep.subr.mxu0 0.0
    %942 = vmatpush1.xpose.msra.mxu0 0.0
    %943 = vmatprep.subr.mxu0 0.0
    %944 = vmatpush1.xpose.msra.mxu0 0.0
    %945 = vmatprep.subr.mxu0 0.0
    %946 = vmatpush1.xpose.msra.mxu0 0.0
    %947 = vmatprep.subr.mxu0 0.0
    %948 = vmatpush1.xpose.msra.mxu0 0.0
    %949 = vmatprep.subr.mxu0 0.0
    %950 = vmatpush1.xpose.msra.mxu0 0.0
    %951 = vmatprep.subr.mxu0 0.0
    %952 = vmatpush1.xpose.msra.mxu0 0.0
    %953 = vmatprep.subr.mxu0 0.0
    %954 = vmatpush1.xpose.msra.mxu0 0.0
    %955 = vmatprep.subr.mxu0 0.0
    %956 = vmatpush1.xpose.msra.mxu0 0.0
    %957 = vmatprep.subr.mxu0 0.0
    %958 = vmatpush1.xpose.msra.mxu0 0.0
    %959 = vmatprep.subr.mxu0 0.0
    %960 = vmatpush1.xpose.msra.mxu0 0.0
    %961 = vmatprep.subr.mxu0 0.0
    %962 = vmatpush1.xpose.msra.mxu0 0.0
    %963 = vmatprep.subr.mxu0 0.0
    %964 = vmatpush1.xpose.msra.mxu0 0.0
    %965 = vmatprep.subr.mxu0 0.0
    %966 = vmatpush1.xpose.msra.mxu0 0.0
    %967 = vmatprep.subr.mxu0 0.0
    %968 = vmatpush1.xpose.msra.mxu0 0.0
    %969 = vmatprep.subr.mxu0 0.0
    %970 = vmatpush1.xpose.msra.mxu0 0.0
    %971 = vmatprep.subr.mxu0 0.0
    %972 = vmatpush1.xpose.msra.mxu0 0.0
    %973 = vmatprep.subr.mxu0 0.0
    %974 = vmatpush1.xpose.msra.mxu0 0.0
    %975 = vmatprep.subr.mxu0 0.0
    %976 = vmatpush1.xpose.msra.mxu0 0.0
    %977 = vmatprep.subr.mxu0 0.0
    %978 = vmatpush1.xpose.msra.mxu0 0.0
    %979 = vmatprep.subr.mxu0 0.0
    %980 = vmatpush1.xpose.msra.mxu0 0.0
    %981 = vmatprep.subr.mxu0 0.0
    %982 = vmatpush1.xpose.msra.mxu0 0.0
    %983 = vmatprep.subr.mxu0 0.0
    %984 = vmatpush1.xpose.msra.mxu0 0.0
    %985 = vmatprep.mubr.f32.mxu0 0.0
    %986 = vmatmul.mubr.f32.gmra.mrb[0].mxu0 %v915
    %v987 = vpop.f32.mrb[0].mxu0
    %v988 = vadd.f32 0.0, %v987
    %v989 = vpop.f32.mrb[0].mxu0
    %990 = vdwg.mxu0
    %v991 = vsel %vm487, %v988, -inf
    %992 = vmax.xlane.f32.xlu0 %v991
    %v993 = vpop.xlane.xlu0 %992
    %v994 = vsub.f32 %v988, %v993
    %v995 = vmul.f32 %v994, 1.442695
    %v996 = vpow.pop %v995
    %v997 = vsel %vm487, %v996, 0.0
    %998 = vadd.xlane.f32.xlu0 %v997
    %v999 = vpop.xlane.xlu0 %998
    %v1000 = vrcp.pop %v999
    %v1001 = vmul.f32 %v996, %v1000
    %1004 = vrot.lane.b32.xlu0 %v399, 120
    %v1005 = vpop.permute.xlu0 %1004
    %1006 = vrot.lane.b32.xlu0 %v404, 120
    %v1007 = vpop.permute.xlu0 %1006
    %v1011 = vsel %vm487, %v1001, 0
    %1013 = vmatprep.subr.mxu0 0.0
    %1014 = vmatpush1.msra.mxu0 %v1005
    %1015 = vmatprep.subr.mxu0 0.0
    %1016 = vmatpush1.msra.mxu0 %v1007
    %1017 = vmatprep.subr.mxu0 0.0
    %1018 = vmatpush1.msra.mxu0 0.0
    %1019 = vmatprep.subr.mxu0 0.0
    %1020 = vmatpush1.msra.mxu0 0.0
    %1021 = vmatprep.subr.mxu0 0.0
    %1022 = vmatpush1.msra.mxu0 0.0
    %1023 = vmatprep.subr.mxu0 0.0
    %1024 = vmatpush1.msra.mxu0 0.0
    %1025 = vmatprep.subr.mxu0 0.0
    %1026 = vmatpush1.msra.mxu0 0.0
    %1027 = vmatprep.subr.mxu0 0.0
    %1028 = vmatpush1.msra.mxu0 0.0
    %1029 = vmatprep.subr.mxu0 0.0
    %1030 = vmatpush1.msra.mxu0 0.0
    %1031 = vmatprep.subr.mxu0 0.0
    %1032 = vmatpush1.msra.mxu0 0.0
    %1033 = vmatprep.subr.mxu0 0.0
    %1034 = vmatpush1.msra.mxu0 0.0
    %1035 = vmatprep.subr.mxu0 0.0
    %1036 = vmatpush1.msra.mxu0 0.0
    %1037 = vmatprep.subr.mxu0 0.0
    %1038 = vmatpush1.msra.mxu0 0.0
    %1039 = vmatprep.subr.mxu0 0.0
    %1040 = vmatpush1.msra.mxu0 0.0
    %1041 = vmatprep.subr.mxu0 0.0
    %1042 = vmatpush1.msra.mxu0 0.0
    %1043 = vmatprep.subr.mxu0 0.0
    %1044 = vmatpush1.msra.mxu0 0.0
    %1045 = vmatprep.subr.mxu0 0.0
    %1046 = vmatpush1.msra.mxu0 0.0
    %1047 = vmatprep.subr.mxu0 0.0
    %1048 = vmatpush1.msra.mxu0 0.0
    %1049 = vmatprep.subr.mxu0 0.0
    %1050 = vmatpush1.msra.mxu0 0.0
    %1051 = vmatprep.subr.mxu0 0.0
    %1052 = vmatpush1.msra.mxu0 0.0
    %1053 = vmatprep.subr.mxu0 0.0
    %1054 = vmatpush1.msra.mxu0 0.0
    %1055 = vmatprep.subr.mxu0 0.0
    %1056 = vmatpush1.msra.mxu0 0.0
    %1057 = vmatprep.subr.mxu0 0.0
    %1058 = vmatpush1.msra.mxu0 0.0
    %1059 = vmatprep.subr.mxu0 0.0
    %1060 = vmatpush1.msra.mxu0 0.0
    %1061 = vmatprep.subr.mxu0 0.0
    %1062 = vmatpush1.msra.mxu0 0.0
    %1063 = vmatprep.subr.mxu0 0.0
    %1064 = vmatpush1.msra.mxu0 0.0
    %1065 = vmatprep.subr.mxu0 0.0
    %1066 = vmatpush1.msra.mxu0 0.0
    %1067 = vmatprep.subr.mxu0 0.0
    %1068 = vmatpush1.msra.mxu0 0.0
    %1069 = vmatprep.subr.mxu0 0.0
    %1070 = vmatpush1.msra.mxu0 0.0
    %1071 = vmatprep.subr.mxu0 0.0
    %1072 = vmatpush1.msra.mxu0 0.0
    %1073 = vmatprep.subr.mxu0 0.0
    %1074 = vmatpush1.msra.mxu0 0.0
    %1075 = vmatprep.subr.mxu0 0.0
    %1076 = vmatpush1.msra.mxu0 0.0
    %1077 = vmatprep.mubr.f32.mxu0 0.0
    %1078 = vmatmul.mubr.f32.gmra.mrb[0].mxu0 %v1011
    %v1079 = vpop.f32.mrb[0].mxu0
    %v1080 = vadd.f32 0.0, %v1079
    %v1081 = vpop.f32.mrb[0].mxu0
    %1082 = vdwg.mxu0
    %1083 = vrot.lane.b32.xlu0 %v163, 112
    %v1084 = vpop.permute.xlu0 %1083
    %1085 = vrot.lane.b32.xlu0 %v273, 112
    %v1086 = vpop.permute.xlu0 %1085
    %1087 = vrot.lane.b32.xlu0 %v278, 112
    %v1088 = vpop.permute.xlu0 %1087
    %v1089 = vsel %vm407, %v1084, 0
    %v1091 = vsel %vm407, %v1086, 0
    %v1093 = vsel %vm407, %v1088, 0
    %1095 = vmatprep.subr.mxu0 0.0
    %1096 = vmatpush1.xpose.msra.mxu0 %v1091
    %1097 = vmatprep.subr.mxu0 0.0
    %1098 = vmatpush1.xpose.msra.mxu0 %v1093
    %1099 = vmatprep.subr.mxu0 0.0
    %1100 = vmatpush1.xpose.msra.mxu0 0.0
    %1101 = vmatprep.subr.mxu0 0.0
    %1102 = vmatpush1.xpose.msra.mxu0 0.0
    %1103 = vmatprep.subr.mxu0 0.0
    %1104 = vmatpush1.xpose.msra.mxu0 0.0
    %1105 = vmatprep.subr.mxu0 0.0
    %1106 = vmatpush1.xpose.msra.mxu0 0.0
    %1107 = vmatprep.subr.mxu0 0.0
    %1108 = vmatpush1.xpose.msra.mxu0 0.0
    %1109 = vmatprep.subr.mxu0 0.0
    %1110 = vmatpush1.xpose.msra.mxu0 0.0
    %1111 = vmatprep.subr.mxu0 0.0
    %1112 = vmatpush1.xpose.msra.mxu0 0.0
    %1113 = vmatprep.subr.mxu0 0.0
    %1114 = vmatpush1.xpose.msra.mxu0 0.0
    %1115 = vmatprep.subr.mxu0 0.0
    %1116 = vmatpush1.xpose.msra.mxu0 0.0
    %1117 = vmatprep.subr.mxu0 0.0
    %1118 = vmatpush1.xpose.msra.mxu0 0.0
    %1119 = vmatprep.subr.mxu0 0.0
    %1120 = vmatpush1.xpose.msra.mxu0 0.0
    %1121 = vmatprep.subr.mxu0 0.0
    %1122 = vmatpush1.xpose.msra.mxu0 0.0
    %1123 = vmatprep.subr.mxu0 0.0
    %1124 = vmatpush1.xpose.msra.mxu0 0.0
    %1125 = vmatprep.subr.mxu0 0.0
    %1126 = vmatpush1.xpose.msra.mxu0 0.0
    %1127 = vmatprep.subr.mxu0 0.0
    %1128 = vmatpush1.xpose.msra.mxu0 0.0
    %1129 = vmatprep.subr.mxu0 0.0
    %1130 = vmatpush1.xpose.msra.mxu0 0.0
    %1131 = vmatprep.subr.mxu0 0.0
    %1132 = vmatpush1.xpose.msra.mxu0 0.0
    %1133 = vmatprep.subr.mxu0 0.0
    %1134 = vmatpush1.xpose.msra.mxu0 0.0
    %1135 = vmatprep.subr.mxu0 0.0
    %1136 = vmatpush1.xpose.msra.mxu0 0.0
    %1137 = vmatprep.subr.mxu0 0.0
    %1138 = vmatpush1.xpose.msra.mxu0 0.0
    %1139 = vmatprep.subr.mxu0 0.0
    %1140 = vmatpush1.xpose.msra.mxu0 0.0
    %1141 = vmatprep.subr.mxu0 0.0
    %1142 = vmatpush1.xpose.msra.mxu0 0.0
    %1143 = vmatprep.subr.mxu0 0.0
    %1144 = vmatpush1.xpose.msra.mxu0 0.0
    %1145 = vmatprep.subr.mxu0 0.0
    %1146 = vmatpush1.xpose.msra.mxu0 0.0
    %1147 = vmatprep.subr.mxu0 0.0
    %1148 = vmatpush1.xpose.msra.mxu0 0.0
    %1149 = vmatprep.subr.mxu0 0.0
    %1150 = vmatpush1.xpose.msra.mxu0 0.0
    %1151 = vmatprep.subr.mxu0 0.0
    %1152 = vmatpush1.xpose.msra.mxu0 0.0
    %1153 = vmatprep.subr.mxu0 0.0
    %1154 = vmatpush1.xpose.msra.mxu0 0.0
    %1155 = vmatprep.subr.mxu0 0.0
    %1156 = vmatpush1.xpose.msra.mxu0 0.0
    %1157 = vmatprep.subr.mxu0 0.0
    %1158 = vmatpush1.xpose.msra.mxu0 0.0
    %1159 = vmatprep.mubr.f32.mxu0 0.0
    %1160 = vmatmul.mubr.f32.gmra.mrb[0].mxu0 %v1089
    %v1161 = vpop.f32.mrb[0].mxu0
    %v1162 = vadd.f32 0.0, %v1161
    %v1163 = vpop.f32.mrb[0].mxu0
    %1164 = vdwg.mxu0
    %v1165 = vsel %vm487, %v1162, -inf
    %1166 = vmax.xlane.f32.xlu0 %v1165
    %v1167 = vpop.xlane.xlu0 %1166
    %v1168 = vsub.f32 %v1162, %v1167
    %v1169 = vmul.f32 %v1168, 1.442695
    %v1170 = vpow.pop %v1169
    %v1171 = vsel %vm487, %v1170, 0.0
    %1172 = vadd.xlane.f32.xlu0 %v1171
    %v1173 = vpop.xlane.xlu0 %1172
    %v1174 = vrcp.pop %v1173
    %v1175 = vmul.f32 %v1170, %v1174
    %1176 = vrot.lane.b32.xlu0 %v389, 112
    %v1177 = vpop.permute.xlu0 %1176
    %1178 = vrot.lane.b32.xlu0 %v394, 112
    %v1179 = vpop.permute.xlu0 %1178
    %v1183 = vsel %vm487, %v1175, 0
    %1185 = vmatprep.subr.mxu0 0.0
    %1186 = vmatpush1.msra.mxu0 %v1177
    %1187 = vmatprep.subr.mxu0 0.0
    %1188 = vmatpush1.msra.mxu0 %v1179
    %1189 = vmatprep.subr.mxu0 0.0
    %1190 = vmatpush1.msra.mxu0 0.0
    %1191 = vmatprep.subr.mxu0 0.0
    %1192 = vmatpush1.msra.mxu0 0.0
    %1193 = vmatprep.subr.mxu0 0.0
    %1194 = vmatpush1.msra.mxu0 0.0
    %1195 = vmatprep.subr.mxu0 0.0
    %1196 = vmatpush1.msra.mxu0 0.0
    %1197 = vmatprep.subr.mxu0 0.0
    %1198 = vmatpush1.msra.mxu0 0.0
    %1199 = vmatprep.subr.mxu0 0.0
    %1200 = vmatpush1.msra.mxu0 0.0
    %1201 = vmatprep.subr.mxu0 0.0
    %1202 = vmatpush1.msra.mxu0 0.0
    %1203 = vmatprep.subr.mxu0 0.0
    %1204 = vmatpush1.msra.mxu0 0.0
    %1205 = vmatprep.subr.mxu0 0.0
    %1206 = vmatpush1.msra.mxu0 0.0
    %1207 = vmatprep.subr.mxu0 0.0
    %1208 = vmatpush1.msra.mxu0 0.0
    %1209 = vmatprep.subr.mxu0 0.0
    %1210 = vmatpush1.msra.mxu0 0.0
    %1211 = vmatprep.subr.mxu0 0.0
    %1212 = vmatpush1.msra.mxu0 0.0
    %1213 = vmatprep.subr.mxu0 0.0
    %1214 = vmatpush1.msra.mxu0 0.0
    %1215 = vmatprep.subr.mxu0 0.0
    %1216 = vmatpush1.msra.mxu0 0.0
    %1217 = vmatprep.subr.mxu0 0.0
    %1218 = vmatpush1.msra.mxu0 0.0
    %1219 = vmatprep.subr.mxu0 0.0
    %1220 = vmatpush1.msra.mxu0 0.0
    %1221 = vmatprep.subr.mxu0 0.0
    %1222 = vmatpush1.msra.mxu0 0.0
    %1223 = vmatprep.subr.mxu0 0.0
    %1224 = vmatpush1.msra.mxu0 0.0
    %1225 = vmatprep.subr.mxu0 0.0
    %1226 = vmatpush1.msra.mxu0 0.0
    %1227 = vmatprep.subr.mxu0 0.0
    %1228 = vmatpush1.msra.mxu0 0.0
    %1229 = vmatprep.subr.mxu0 0.0
    %1230 = vmatpush1.msra.mxu0 0.0
    %1231 = vmatprep.subr.mxu0 0.0
    %1232 = vmatpush1.msra.mxu0 0.0
    %1233 = vmatprep.subr.mxu0 0.0
    %1234 = vmatpush1.msra.mxu0 0.0
    %1235 = vmatprep.subr.mxu0 0.0
    %1236 = vmatpush1.msra.mxu0 0.0
    %1237 = vmatprep.subr.mxu0 0.0
    %1238 = vmatpush1.msra.mxu0 0.0
    %1239 = vmatprep.subr.mxu0 0.0
    %1240 = vmatpush1.msra.mxu0 0.0
    %1241 = vmatprep.subr.mxu0 0.0
    %1242 = vmatpush1.msra.mxu0 0.0
    %1243 = vmatprep.subr.mxu0 0.0
    %1244 = vmatpush1.msra.mxu0 0.0
    %1245 = vmatprep.subr.mxu0 0.0
    %1246 = vmatpush1.msra.mxu0 0.0
    %1247 = vmatprep.subr.mxu0 0.0
    %1248 = vmatpush1.msra.mxu0 0.0
    %1249 = vmatprep.mubr.f32.mxu0 0.0
    %1250 = vmatmul.mubr.f32.gmra.mrb[0].mxu0 %v1183
    %v1251 = vpop.f32.mrb[0].mxu0
    %v1252 = vadd.f32 0.0, %v1251
    %v1253 = vpop.f32.mrb[0].mxu0
    %1254 = vdwg.mxu0
    %1255 = vrot.lane.b32.xlu0 %v168, 112
    %v1256 = vpop.permute.xlu0 %1255
    %1257 = vrot.lane.b32.xlu0 %v283, 112
    %v1258 = vpop.permute.xlu0 %1257
    %1259 = vrot.lane.b32.xlu0 %v288, 112
    %v1260 = vpop.permute.xlu0 %1259
    %v1261 = vsel %vm407, %v1256, 0
    %v1263 = vsel %vm407, %v1258, 0
    %v1265 = vsel %vm407, %v1260, 0
    %1267 = vmatprep.subr.mxu0 0.0
    %1268 = vmatpush1.xpose.msra.mxu0 %v1263
    %1269 = vmatprep.subr.mxu0 0.0
    %1270 = vmatpush1.xpose.msra.mxu0 %v1265
    %1271 = vmatprep.subr.mxu0 0.0
    %1272 = vmatpush1.xpose.msra.mxu0 0.0
    %1273 = vmatprep.subr.mxu0 0.0
    %1274 = vmatpush1.xpose.msra.mxu0 0.0
    %1275 = vmatprep.subr.mxu0 0.0
    %1276 = vmatpush1.xpose.msra.mxu0 0.0
    %1277 = vmatprep.subr.mxu0 0.0
    %1278 = vmatpush1.xpose.msra.mxu0 0.0
    %1279 = vmatprep.subr.mxu0 0.0
    %1280 = vmatpush1.xpose.msra.mxu0 0.0
    %1281 = vmatprep.subr.mxu0 0.0
    %1282 = vmatpush1.xpose.msra.mxu0 0.0
    %1283 = vmatprep.subr.mxu0 0.0
    %1284 = vmatpush1.xpose.msra.mxu0 0.0
    %1285 = vmatprep.subr.mxu0 0.0
    %1286 = vmatpush1.xpose.msra.mxu0 0.0
    %1287 = vmatprep.subr.mxu0 0.0
    %1288 = vmatpush1.xpose.msra.mxu0 0.0
    %1289 = vmatprep.subr.mxu0 0.0
    %1290 = vmatpush1.xpose.msra.mxu0 0.0
    %1291 = vmatprep.subr.mxu0 0.0
    %1292 = vmatpush1.xpose.msra.mxu0 0.0
    %1293 = vmatprep.subr.mxu0 0.0
    %1294 = vmatpush1.xpose.msra.mxu0 0.0
    %1295 = vmatprep.subr.mxu0 0.0
    %1296 = vmatpush1.xpose.msra.mxu0 0.0
    %1297 = vmatprep.subr.mxu0 0.0
    %1298 = vmatpush1.xpose.msra.mxu0 0.0
    %1299 = vmatprep.subr.mxu0 0.0
    %1300 = vmatpush1.xpose.msra.mxu0 0.0
    %1301 = vmatprep.subr.mxu0 0.0
    %1302 = vmatpush1.xpose.msra.mxu0 0.0
    %1303 = vmatprep.subr.mxu0 0.0
    %1304 = vmatpush1.xpose.msra.mxu0 0.0
    %1305 = vmatprep.subr.mxu0 0.0
    %1306 = vmatpush1.xpose.msra.mxu0 0.0
    %1307 = vmatprep.subr.mxu0 0.0
    %1308 = vmatpush1.xpose.msra.mxu0 0.0
    %1309 = vmatprep.subr.mxu0 0.0
    %1310 = vmatpush1.xpose.msra.mxu0 0.0
    %1311 = vmatprep.subr.mxu0 0.0
    %1312 = vmatpush1.xpose.msra.mxu0 0.0
    %1313 = vmatprep.subr.mxu0 0.0
    %1314 = vmatpush1.xpose.msra.mxu0 0.0
    %1315 = vmatprep.subr.mxu0 0.0
    %1316 = vmatpush1.xpose.msra.mxu0 0.0
    %1317 = vmatprep.subr.mxu0 0.0
    %1318 = vmatpush1.xpose.msra.mxu0 0.0
    %1319 = vmatprep.subr.mxu0 0.0
    %1320 = vmatpush1.xpose.msra.mxu0 0.0
    %1321 = vmatprep.subr.mxu0 0.0
    %1322 = vmatpush1.xpose.msra.mxu0 0.0
    %1323 = vmatprep.subr.mxu0 0.0
    %1324 = vmatpush1.xpose.msra.mxu0 0.0
    %1325 = vmatprep.subr.mxu0 0.0
    %1326 = vmatpush1.xpose.msra.mxu0 0.0
    %1327 = vmatprep.subr.mxu0 0.0
    %1328 = vmatpush1.xpose.msra.mxu0 0.0
    %1329 = vmatprep.subr.mxu0 0.0
    %1330 = vmatpush1.xpose.msra.mxu0 0.0
    %1331 = vmatprep.mubr.f32.mxu0 0.0
    %1332 = vmatmul.mubr.f32.gmra.mrb[0].mxu0 %v1261
    %v1333 = vpop.f32.mrb[0].mxu0
    %v1334 = vadd.f32 0.0, %v1333
    %v1335 = vpop.f32.mrb[0].mxu0
    %1336 = vdwg.mxu0
    %v1337 = vsel %vm487, %v1334, -inf
    %1338 = vmax.xlane.f32.xlu0 %v1337
    %v1339 = vpop.xlane.xlu0 %1338
    %v1340 = vsub.f32 %v1334, %v1339
    %v1341 = vmul.f32 %v1340, 1.442695
    %v1342 = vpow.pop %v1341
    %v1343 = vsel %vm487, %v1342, 0.0
    %1344 = vadd.xlane.f32.xlu0 %v1343
    %v1345 = vpop.xlane.xlu0 %1344
    %v1346 = vrcp.pop %v1345
    %v1347 = vmul.f32 %v1342, %v1346
    %1348 = vrot.lane.b32.xlu0 %v399, 112
    %v1349 = vpop.permute.xlu0 %1348
    %1350 = vrot.lane.b32.xlu0 %v404, 112
    %v1351 = vpop.permute.xlu0 %1350
    %v1355 = vsel %vm487, %v1347, 0
    %1357 = vmatprep.subr.mxu0 0.0
    %1358 = vmatpush1.msra.mxu0 %v1349
    %1359 = vmatprep.subr.mxu0 0.0
    %1360 = vmatpush1.msra.mxu0 %v1351
    %1361 = vmatprep.subr.mxu0 0.0
    %1362 = vmatpush1.msra.mxu0 0.0
    %1363 = vmatprep.subr.mxu0 0.0
    %1364 = vmatpush1.msra.mxu0 0.0
    %1365 = vmatprep.subr.mxu0 0.0
    %1366 = vmatpush1.msra.mxu0 0.0
    %1367 = vmatprep.subr.mxu0 0.0
    %1368 = vmatpush1.msra.mxu0 0.0
    %1369 = vmatprep.subr.mxu0 0.0
    %1370 = vmatpush1.msra.mxu0 0.0
    %1371 = vmatprep.subr.mxu0 0.0
    %1372 = vmatpush1.msra.mxu0 0.0
    %1373 = vmatprep.subr.mxu0 0.0
    %1374 = vmatpush1.msra.mxu0 0.0
    %1375 = vmatprep.subr.mxu0 0.0
    %1376 = vmatpush1.msra.mxu0 0.0
    %1377 = vmatprep.subr.mxu0 0.0
    %1378 = vmatpush1.msra.mxu0 0.0
    %1379 = vmatprep.subr.mxu0 0.0
    %1380 = vmatpush1.msra.mxu0 0.0
    %1381 = vmatprep.subr.mxu0 0.0
    %1382 = vmatpush1.msra.mxu0 0.0
    %1383 = vmatprep.subr.mxu0 0.0
    %1384 = vmatpush1.msra.mxu0 0.0
    %1385 = vmatprep.subr.mxu0 0.0
    %1386 = vmatpush1.msra.mxu0 0.0
    %1387 = vmatprep.subr.mxu0 0.0
    %1388 = vmatpush1.msra.mxu0 0.0
    %1389 = vmatprep.subr.mxu0 0.0
    %1390 = vmatpush1.msra.mxu0 0.0
    %1391 = vmatprep.subr.mxu0 0.0
    %1392 = vmatpush1.msra.mxu0 0.0
    %1393 = vmatprep.subr.mxu0 0.0
    %1394 = vmatpush1.msra.mxu0 0.0
    %1395 = vmatprep.subr.mxu0 0.0
    %1396 = vmatpush1.msra.mxu0 0.0
    %1397 = vmatprep.subr.mxu0 0.0
    %1398 = vmatpush1.msra.mxu0 0.0
    %1399 = vmatprep.subr.mxu0 0.0
    %1400 = vmatpush1.msra.mxu0 0.0
    %1401 = vmatprep.subr.mxu0 0.0
    %1402 = vmatpush1.msra.mxu0 0.0
    %1403 = vmatprep.subr.mxu0 0.0
    %1404 = vmatpush1.msra.mxu0 0.0
    %1405 = vmatprep.subr.mxu0 0.0
    %1406 = vmatpush1.msra.mxu0 0.0
    %1407 = vmatprep.subr.mxu0 0.0
    %1408 = vmatpush1.msra.mxu0 0.0
    %1409 = vmatprep.subr.mxu0 0.0
    %1410 = vmatpush1.msra.mxu0 0.0
    %1411 = vmatprep.subr.mxu0 0.0
    %1412 = vmatpush1.msra.mxu0 0.0
    %1413 = vmatprep.subr.mxu0 0.0
    %1414 = vmatpush1.msra.mxu0 0.0
    %1415 = vmatprep.subr.mxu0 0.0
    %1416 = vmatpush1.msra.mxu0 0.0
    %1417 = vmatprep.subr.mxu0 0.0
    %1418 = vmatpush1.msra.mxu0 0.0
    %1419 = vmatprep.subr.mxu0 0.0
    %1420 = vmatpush1.msra.mxu0 0.0
    %1421 = vmatprep.mubr.f32.mxu0 0.0
    %1422 = vmatmul.mubr.f32.gmra.mrb[0].mxu0 %v1355
    %v1423 = vpop.f32.mrb[0].mxu0
    %v1424 = vadd.f32 0.0, %v1423
    %v1425 = vpop.f32.mrb[0].mxu0
    %1426 = vdwg.mxu0
    %1427 = vrot.lane.b32.xlu0 %v163, 104
    %v1428 = vpop.permute.xlu0 %1427
    %1429 = vrot.lane.b32.xlu0 %v273, 104
    %v1430 = vpop.permute.xlu0 %1429
    %1431 = vrot.lane.b32.xlu0 %v278, 104
    %v1432 = vpop.permute.xlu0 %1431
    %v1433 = vsel %vm407, %v1428, 0
    %v1435 = vsel %vm407, %v1430, 0
    %v1437 = vsel %vm407, %v1432, 0
    %1439 = vmatprep.subr.mxu0 0.0
    %1440 = vmatpush1.xpose.msra.mxu0 %v1435
    %1441 = vmatprep.subr.mxu0 0.0
    %1442 = vmatpush1.xpose.msra.mxu0 %v1437
    %1443 = vmatprep.subr.mxu0 0.0
    %1444 = vmatpush1.xpose.msra.mxu0 0.0
    %1445 = vmatprep.subr.mxu0 0.0
    %1446 = vmatpush1.xpose.msra.mxu0 0.0
    %1447 = vmatprep.subr.mxu0 0.0
    %1448 = vmatpush1.xpose.msra.mxu0 0.0
    %1449 = vmatprep.subr.mxu0 0.0
    %1450 = vmatpush1.xpose.msra.mxu0 0.0
    %1451 = vmatprep.subr.mxu0 0.0
    %1452 = vmatpush1.xpose.msra.mxu0 0.0
    %1453 = vmatprep.subr.mxu0 0.0
    %1454 = vmatpush1.xpose.msra.mxu0 0.0
    %1455 = vmatprep.subr.mxu0 0.0
    %1456 = vmatpush1.xpose.msra.mxu0 0.0
    %1457 = vmatprep.subr.mxu0 0.0
    %1458 = vmatpush1.xpose.msra.mxu0 0.0
    %1459 = vmatprep.subr.mxu0 0.0
    %1460 = vmatpush1.xpose.msra.mxu0 0.0
    %1461 = vmatprep.subr.mxu0 0.0
    %1462 = vmatpush1.xpose.msra.mxu0 0.0
    %1463 = vmatprep.subr.mxu0 0.0
    %1464 = vmatpush1.xpose.msra.mxu0 0.0
    %1465 = vmatprep.subr.mxu0 0.0
    %1466 = vmatpush1.xpose.msra.mxu0 0.0
    %1467 = vmatprep.subr.mxu0 0.0
    %1468 = vmatpush1.xpose.msra.mxu0 0.0
    %1469 = vmatprep.subr.mxu0 0.0
    %1470 = vmatpush1.xpose.msra.mxu0 0.0
    %1471 = vmatprep.subr.mxu0 0.0
    %1472 = vmatpush1.xpose.msra.mxu0 0.0
    %1473 = vmatprep.subr.mxu0 0.0
    %1474 = vmatpush1.xpose.msra.mxu0 0.0
    %1475 = vmatprep.subr.mxu0 0.0
    %1476 = vmatpush1.xpose.msra.mxu0 0.0
    %1477 = vmatprep.subr.mxu0 0.0
    %1478 = vmatpush1.xpose.msra.mxu0 0.0
    %1479 = vmatprep.subr.mxu0 0.0
    %1480 = vmatpush1.xpose.msra.mxu0 0.0
    %1481 = vmatprep.subr.mxu0 0.0
    %1482 = vmatpush1.xpose.msra.mxu0 0.0
    %1483 = vmatprep.subr.mxu0 0.0
    %1484 = vmatpush1.xpose.msra.mxu0 0.0
    %1485 = vmatprep.subr.mxu0 0.0
    %1486 = vmatpush1.xpose.msra.mxu0 0.0
    %1487 = vmatprep.subr.mxu0 0.0
    %1488 = vmatpush1.xpose.msra.mxu0 0.0
    %1489 = vmatprep.subr.mxu0 0.0
    %1490 = vmatpush1.xpose.msra.mxu0 0.0
    %1491 = vmatprep.subr.mxu0 0.0
    %1492 = vmatpush1.xpose.msra.mxu0 0.0
    %1493 = vmatprep.subr.mxu0 0.0
    %1494 = vmatpush1.xpose.msra.mxu0 0.0
    %1495 = vmatprep.subr.mxu0 0.0
    %1496 = vmatpush1.xpose.msra.mxu0 0.0
    %1497 = vmatprep.subr.mxu0 0.0
    %1498 = vmatpush1.xpose.msra.mxu0 0.0
    %1499 = vmatprep.subr.mxu0 0.0
    %1500 = vmatpush1.xpose.msra.mxu0 0.0
    %1501 = vmatprep.subr.mxu0 0.0
    %1502 = vmatpush1.xpose.msra.mxu0 0.0
    %1503 = vmatprep.mubr.f32.mxu0 0.0
    %1504 = vmatmul.mubr.f32.gmra.mrb[0].mxu0 %v1433
    %v1505 = vpop.f32.mrb[0].mxu0
    %v1506 = vadd.f32 0.0, %v1505
    %v1507 = vpop.f32.mrb[0].mxu0
    %1508 = vdwg.mxu0
    %v1509 = vsel %vm487, %v1506, -inf
    %1510 = vmax.xlane.f32.xlu0 %v1509
    %v1511 = vpop.xlane.xlu0 %1510
    %v1512 = vsub.f32 %v1506, %v1511
    %v1513 = vmul.f32 %v1512, 1.442695
    %v1514 = vpow.pop %v1513
    %v1515 = vsel %vm487, %v1514, 0.0
    %1516 = vadd.xlane.f32.xlu0 %v1515
    %v1517 = vpop.xlane.xlu0 %1516
    %v1518 = vrcp.pop %v1517
    %v1519 = vmul.f32 %v1514, %v1518
    %1520 = vrot.lane.b32.xlu0 %v389, 104
    %v1521 = vpop.permute.xlu0 %1520
    %1522 = vrot.lane.b32.xlu0 %v394, 104
    %v1523 = vpop.permute.xlu0 %1522
    %v1527 = vsel %vm487, %v1519, 0
    %1529 = vmatprep.subr.mxu0 0.0
    %1530 = vmatpush1.msra.mxu0 %v1521
    %1531 = vmatprep.subr.mxu0 0.0
    %1532 = vmatpush1.msra.mxu0 %v1523
    %1533 = vmatprep.subr.mxu0 0.0
    %1534 = vmatpush1.msra.mxu0 0.0
    %1535 = vmatprep.subr.mxu0 0.0
    %1536 = vmatpush1.msra.mxu0 0.0
    %1537 = vmatprep.subr.mxu0 0.0
    %1538 = vmatpush1.msra.mxu0 0.0
    %1539 = vmatprep.subr.mxu0 0.0
    %1540 = vmatpush1.msra.mxu0 0.0
    %1541 = vmatprep.subr.mxu0 0.0
    %1542 = vmatpush1.msra.mxu0 0.0
    %1543 = vmatprep.subr.mxu0 0.0
    %1544 = vmatpush1.msra.mxu0 0.0
    %1545 = vmatprep.subr.mxu0 0.0
    %1546 = vmatpush1.msra.mxu0 0.0
    %1547 = vmatprep.subr.mxu0 0.0
    %1548 = vmatpush1.msra.mxu0 0.0
    %1549 = vmatprep.subr.mxu0 0.0
    %1550 = vmatpush1.msra.mxu0 0.0
    %1551 = vmatprep.subr.mxu0 0.0
    %1552 = vmatpush1.msra.mxu0 0.0
    %1553 = vmatprep.subr.mxu0 0.0
    %1554 = vmatpush1.msra.mxu0 0.0
    %1555 = vmatprep.subr.mxu0 0.0
    %1556 = vmatpush1.msra.mxu0 0.0
    %1557 = vmatprep.subr.mxu0 0.0
    %1558 = vmatpush1.msra.mxu0 0.0
    %1559 = vmatprep.subr.mxu0 0.0
    %1560 = vmatpush1.msra.mxu0 0.0
    %1561 = vmatprep.subr.mxu0 0.0
    %1562 = vmatpush1.msra.mxu0 0.0
    %1563 = vmatprep.subr.mxu0 0.0
    %1564 = vmatpush1.msra.mxu0 0.0
    %1565 = vmatprep.subr.mxu0 0.0
    %1566 = vmatpush1.msra.mxu0 0.0
    %1567 = vmatprep.subr.mxu0 0.0
    %1568 = vmatpush1.msra.mxu0 0.0
    %1569 = vmatprep.subr.mxu0 0.0
    %1570 = vmatpush1.msra.mxu0 0.0
    %1571 = vmatprep.subr.mxu0 0.0
    %1572 = vmatpush1.msra.mxu0 0.0
    %1573 = vmatprep.subr.mxu0 0.0
    %1574 = vmatpush1.msra.mxu0 0.0
    %1575 = vmatprep.subr.mxu0 0.0
    %1576 = vmatpush1.msra.mxu0 0.0
    %1577 = vmatprep.subr.mxu0 0.0
    %1578 = vmatpush1.msra.mxu0 0.0
    %1579 = vmatprep.subr.mxu0 0.0
    %1580 = vmatpush1.msra.mxu0 0.0
    %1581 = vmatprep.subr.mxu0 0.0
    %1582 = vmatpush1.msra.mxu0 0.0
    %1583 = vmatprep.subr.mxu0 0.0
    %1584 = vmatpush1.msra.mxu0 0.0
    %1585 = vmatprep.subr.mxu0 0.0
    %1586 = vmatpush1.msra.mxu0 0.0
    %1587 = vmatprep.subr.mxu0 0.0
    %1588 = vmatpush1.msra.mxu0 0.0
    %1589 = vmatprep.subr.mxu0 0.0
    %1590 = vmatpush1.msra.mxu0 0.0
    %1591 = vmatprep.subr.mxu0 0.0
    %1592 = vmatpush1.msra.mxu0 0.0
    %1593 = vmatprep.mubr.f32.mxu0 0.0
    %1594 = vmatmul.mubr.f32.gmra.mrb[0].mxu0 %v1527
    %v1595 = vpop.f32.mrb[0].mxu0
    %v1596 = vadd.f32 0.0, %v1595
    %v1597 = vpop.f32.mrb[0].mxu0
    %1598 = vdwg.mxu0
    %1599 = vrot.lane.b32.xlu0 %v168, 104
    %v1600 = vpop.permute.xlu0 %1599
    %1601 = vrot.lane.b32.xlu0 %v283, 104
    %v1602 = vpop.permute.xlu0 %1601
    %1603 = vrot.lane.b32.xlu0 %v288, 104
    %v1604 = vpop.permute.xlu0 %1603
    %v1605 = vsel %vm407, %v1600, 0
    %v1607 = vsel %vm407, %v1602, 0
    %v1609 = vsel %vm407, %v1604, 0
    %1611 = vmatprep.subr.mxu0 0.0
    %1612 = vmatpush1.xpose.msra.mxu0 %v1607
    %1613 = vmatprep.subr.mxu0 0.0
    %1614 = vmatpush1.xpose.msra.mxu0 %v1609
    %1615 = vmatprep.subr.mxu0 0.0
    %1616 = vmatpush1.xpose.msra.mxu0 0.0
    %1617 = vmatprep.subr.mxu0 0.0
    %1618 = vmatpush1.xpose.msra.mxu0 0.0
    %1619 = vmatprep.subr.mxu0 0.0
    %1620 = vmatpush1.xpose.msra.mxu0 0.0
    %1621 = vmatprep.subr.mxu0 0.0
    %1622 = vmatpush1.xpose.msra.mxu0 0.0
    %1623 = vmatprep.subr.mxu0 0.0
    %1624 = vmatpush1.xpose.msra.mxu0 0.0
    %1625 = vmatprep.subr.mxu0 0.0
    %1626 = vmatpush1.xpose.msra.mxu0 0.0
    %1627 = vmatprep.subr.mxu0 0.0
    %1628 = vmatpush1.xpose.msra.mxu0 0.0
    %1629 = vmatprep.subr.mxu0 0.0
    %1630 = vmatpush1.xpose.msra.mxu0 0.0
    %1631 = vmatprep.subr.mxu0 0.0
    %1632 = vmatpush1.xpose.msra.mxu0 0.0
    %1633 = vmatprep.subr.mxu0 0.0
    %1634 = vmatpush1.xpose.msra.mxu0 0.0
    %1635 = vmatprep.subr.mxu0 0.0
    %1636 = vmatpush1.xpose.msra.mxu0 0.0
    %1637 = vmatprep.subr.mxu0 0.0
    %1638 = vmatpush1.xpose.msra.mxu0 0.0
    %1639 = vmatprep.subr.mxu0 0.0
    %1640 = vmatpush1.xpose.msra.mxu0 0.0
    %1641 = vmatprep.subr.mxu0 0.0
    %1642 = vmatpush1.xpose.msra.mxu0 0.0
    %1643 = vmatprep.subr.mxu0 0.0
    %1644 = vmatpush1.xpose.msra.mxu0 0.0
    %1645 = vmatprep.subr.mxu0 0.0
    %1646 = vmatpush1.xpose.msra.mxu0 0.0
    %1647 = vmatprep.subr.mxu0 0.0
    %1648 = vmatpush1.xpose.msra.mxu0 0.0
    %1649 = vmatprep.subr.mxu0 0.0
    %1650 = vmatpush1.xpose.msra.mxu0 0.0
    %1651 = vmatprep.subr.mxu0 0.0
    %1652 = vmatpush1.xpose.msra.mxu0 0.0
    %1653 = vmatprep.subr.mxu0 0.0
    %1654 = vmatpush1.xpose.msra.mxu0 0.0
    %1655 = vmatprep.subr.mxu0 0.0
    %1656 = vmatpush1.xpose.msra.mxu0 0.0
    %1657 = vmatprep.subr.mxu0 0.0
    %1658 = vmatpush1.xpose.msra.mxu0 0.0
    %1659 = vmatprep.subr.mxu0 0.0
    %1660 = vmatpush1.xpose.msra.mxu0 0.0
    %1661 = vmatprep.subr.mxu0 0.0
    %1662 = vmatpush1.xpose.msra.mxu0 0.0
    %1663 = vmatprep.subr.mxu0 0.0
    %1664 = vmatpush1.xpose.msra.mxu0 0.0
    %1665 = vmatprep.subr.mxu0 0.0
    %1666 = vmatpush1.xpose.msra.mxu0 0.0
    %1667 = vmatprep.subr.mxu0 0.0
    %1668 = vmatpush1.xpose.msra.mxu0 0.0
    %1669 = vmatprep.subr.mxu0 0.0
    %1670 = vmatpush1.xpose.msra.mxu0 0.0
    %1671 = vmatprep.subr.mxu0 0.0
    %1672 = vmatpush1.xpose.msra.mxu0 0.0
    %1673 = vmatprep.subr.mxu0 0.0
    %1674 = vmatpush1.xpose.msra.mxu0 0.0
    %1675 = vmatprep.mubr.f32.mxu0 0.0
    %1676 = vmatmul.mubr.f32.gmra.mrb[0].mxu0 %v1605
    %v1677 = vpop.f32.mrb[0].mxu0
    %v1678 = vadd.f32 0.0, %v1677
    %v1679 = vpop.f32.mrb[0].mxu0
    %1680 = vdwg.mxu0
    %v1681 = vsel %vm487, %v1678, -inf
    %1682 = vmax.xlane.f32.xlu0 %v1681
    %v1683 = vpop.xlane.xlu0 %1682
    %v1684 = vsub.f32 %v1678, %v1683
    %v1685 = vmul.f32 %v1684, 1.442695
    %v1686 = vpow.pop %v1685
    %v1687 = vsel %vm487, %v1686, 0.0
    %1688 = vadd.xlane.f32.xlu0 %v1687
    %v1689 = vpop.xlane.xlu0 %1688
    %v1690 = vrcp.pop %v1689
    %v1691 = vmul.f32 %v1686, %v1690
    %1692 = vrot.lane.b32.xlu0 %v399, 104
    %v1693 = vpop.permute.xlu0 %1692
    %1694 = vrot.lane.b32.xlu0 %v404, 104
    %v1695 = vpop.permute.xlu0 %1694
    %v1699 = vsel %vm487, %v1691, 0
    %1701 = vmatprep.subr.mxu0 0.0
    %1702 = vmatpush1.msra.mxu0 %v1693
    %1703 = vmatprep.subr.mxu0 0.0
    %1704 = vmatpush1.msra.mxu0 %v1695
    %1705 = vmatprep.subr.mxu0 0.0
    %1706 = vmatpush1.msra.mxu0 0.0
    %1707 = vmatprep.subr.mxu0 0.0
    %1708 = vmatpush1.msra.mxu0 0.0
    %1709 = vmatprep.subr.mxu0 0.0
    %1710 = vmatpush1.msra.mxu0 0.0
    %1711 = vmatprep.subr.mxu0 0.0
    %1712 = vmatpush1.msra.mxu0 0.0
    %1713 = vmatprep.subr.mxu0 0.0
    %1714 = vmatpush1.msra.mxu0 0.0
    %1715 = vmatprep.subr.mxu0 0.0
    %1716 = vmatpush1.msra.mxu0 0.0
    %1717 = vmatprep.subr.mxu0 0.0
    %1718 = vmatpush1.msra.mxu0 0.0
    %1719 = vmatprep.subr.mxu0 0.0
    %1720 = vmatpush1.msra.mxu0 0.0
    %1721 = vmatprep.subr.mxu0 0.0
    %1722 = vmatpush1.msra.mxu0 0.0
    %1723 = vmatprep.subr.mxu0 0.0
    %1724 = vmatpush1.msra.mxu0 0.0
    %1725 = vmatprep.subr.mxu0 0.0
    %1726 = vmatpush1.msra.mxu0 0.0
    %1727 = vmatprep.subr.mxu0 0.0
    %1728 = vmatpush1.msra.mxu0 0.0
    %1729 = vmatprep.subr.mxu0 0.0
    %1730 = vmatpush1.msra.mxu0 0.0
    %1731 = vmatprep.subr.mxu0 0.0
    %1732 = vmatpush1.msra.mxu0 0.0
    %1733 = vmatprep.subr.mxu0 0.0
    %1734 = vmatpush1.msra.mxu0 0.0
    %1735 = vmatprep.subr.mxu0 0.0
    %1736 = vmatpush1.msra.mxu0 0.0
    %1737 = vmatprep.subr.mxu0 0.0
    %1738 = vmatpush1.msra.mxu0 0.0
    %1739 = vmatprep.subr.mxu0 0.0
    %1740 = vmatpush1.msra.mxu0 0.0
    %1741 = vmatprep.subr.mxu0 0.0
    %1742 = vmatpush1.msra.mxu0 0.0
    %1743 = vmatprep.subr.mxu0 0.0
    %1744 = vmatpush1.msra.mxu0 0.0
    %1745 = vmatprep.subr.mxu0 0.0
    %1746 = vmatpush1.msra.mxu0 0.0
    %1747 = vmatprep.subr.mxu0 0.0
    %1748 = vmatpush1.msra.mxu0 0.0
    %1749 = vmatprep.subr.mxu0 0.0
    %1750 = vmatpush1.msra.mxu0 0.0
    %1751 = vmatprep.subr.mxu0 0.0
    %1752 = vmatpush1.msra.mxu0 0.0
    %1753 = vmatprep.subr.mxu0 0.0
    %1754 = vmatpush1.msra.mxu0 0.0
    %1755 = vmatprep.subr.mxu0 0.0
    %1756 = vmatpush1.msra.mxu0 0.0
    %1757 = vmatprep.subr.mxu0 0.0
    %1758 = vmatpush1.msra.mxu0 0.0
    %1759 = vmatprep.subr.mxu0 0.0
    %1760 = vmatpush1.msra.mxu0 0.0
    %1761 = vmatprep.subr.mxu0 0.0
    %1762 = vmatpush1.msra.mxu0 0.0
    %1763 = vmatprep.subr.mxu0 0.0
    %1764 = vmatpush1.msra.mxu0 0.0
    %1765 = vmatprep.mubr.f32.mxu0 0.0
    %1766 = vmatmul.mubr.f32.gmra.mrb[0].mxu0 %v1699
    %v1767 = vpop.f32.mrb[0].mxu0
    %v1768 = vadd.f32 0.0, %v1767
    %v1769 = vpop.f32.mrb[0].mxu0
    %1770 = vdwg.mxu0
    %1773 = vrot.lane.b32.xlu0 %v906, 8
    %v1774 = vpop.permute.xlu0 %1773
    %1775 = vrot.lane.b32.xlu0 %v1080, 8
    %v1776 = vpop.permute.xlu0 %1775
    %1781 = vrot.lane.b32.xlu0 %v1252, 16
    %v1782 = vpop.permute.xlu0 %1781
    %1783 = vrot.lane.b32.xlu0 %v1424, 16
    %v1784 = vpop.permute.xlu0 %1783
    %1789 = vrot.lane.b32.xlu0 %v1596, 24
    %v1790 = vpop.permute.xlu0 %1789
    %1791 = vrot.lane.b32.xlu0 %v1768, 24
    %v1792 = vpop.permute.xlu0 %1791
    %v1795 = vsel %vm407, %v569, %v1774
    %v1796 = vsel %vm407, %v732, %v1776
    %v1797 = vsel %vm487, %v1795, %v1782
    %v1798 = vsel %vm487, %v1796, %v1784
    %vm1799 = vcmask 195584
    %v1800 = vsel %vm1799, %v1797, %v1790
    %v1801 = vsel %vm1799, %v1798, %v1792
    %1802 = vrot.lane.b32.xlu0 %v76, 32
    %v1803 = vpop.permute.xlu0 %1802
    %1804 = vrot.lane.b32.xlu0 %v77, 32
    %v1805 = vpop.permute.xlu0 %1804
    %1806 = vrot.lane.b32.xlu0 %v78, 32
    %v1807 = vpop.permute.xlu0 %1806
    %1808 = vrot.lane.b32.xlu0 %v79, 32
    %v1809 = vpop.permute.xlu0 %1808
    %1814 = vrot.lane.b32.xlu0 %v87, 32
    %v1815 = vpop.permute.xlu0 %1814
    %v1818 = vsel %vm89, %v1800, 0
    %v1821 = vsel %vm89, %v1801, 0
    %1823 = vmatprep.subr.mxu0 0.0
    %1824 = vmatpush1.msra.mxu0 %v1803
    %1825 = vmatprep.subr.mxu0 0.0
    %1826 = vmatpush1.msra.mxu0 %v1805
    %1827 = vmatprep.subr.mxu0 0.0
    %1828 = vmatpush1.msra.mxu0 %v1807
    %1829 = vmatprep.subr.mxu0 0.0
    %1830 = vmatpush1.msra.mxu0 %v1809
    %1831 = vmatprep.subr.mxu0 0.0
    %1832 = vmatpush1.msra.mxu0 0.0
    %1833 = vmatprep.subr.mxu0 0.0
    %1834 = vmatpush1.msra.mxu0 0.0
    %1835 = vmatprep.subr.mxu0 0.0
    %1836 = vmatpush1.msra.mxu0 0.0
    %1837 = vmatprep.subr.mxu0 0.0
    %1838 = vmatpush1.msra.mxu0 0.0
    %1839 = vmatprep.subr.mxu0 0.0
    %1840 = vmatpush1.msra.mxu0 0.0
    %1841 = vmatprep.subr.mxu0 0.0
    %1842 = vmatpush1.msra.mxu0 0.0
    %1843 = vmatprep.subr.mxu0 0.0
    %1844 = vmatpush1.msra.mxu0 0.0
    %1845 = vmatprep.subr.mxu0 0.0
    %1846 = vmatpush1.msra.mxu0 0.0
    %1847 = vmatprep.subr.mxu0 0.0
    %1848 = vmatpush1.msra.mxu0 0.0
    %1849 = vmatprep.subr.mxu0 0.0
    %1850 = vmatpush1.msra.mxu0 0.0
    %1851 = vmatprep.subr.mxu0 0.0
    %1852 = vmatpush1.msra.mxu0 0.0
    %1853 = vmatprep.subr.mxu0 0.0
    %1854 = vmatpush1.msra.mxu0 0.0
    %1855 = vmatprep.subr.mxu0 0.0
    %1856 = vmatpush1.msra.mxu0 0.0
    %1857 = vmatprep.subr.mxu0 0.0
    %1858 = vmatpush1.msra.mxu0 0.0
    %1859 = vmatprep.subr.mxu0 0.0
    %1860 = vmatpush1.msra.mxu0 0.0
    %1861 = vmatprep.subr.mxu0 0.0
    %1862 = vmatpush1.msra.mxu0 0.0
    %1863 = vmatprep.subr.mxu0 0.0
    %1864 = vmatpush1.msra.mxu0 0.0
    %1865 = vmatprep.subr.mxu0 0.0
    %1866 = vmatpush1.msra.mxu0 0.0
    %1867 = vmatprep.subr.mxu0 0.0
    %1868 = vmatpush1.msra.mxu0 0.0
    %1869 = vmatprep.subr.mxu0 0.0
    %1870 = vmatpush1.msra.mxu0 0.0
    %1871 = vmatprep.subr.mxu0 0.0
    %1872 = vmatpush1.msra.mxu0 0.0
    %1873 = vmatprep.subr.mxu0 0.0
    %1874 = vmatpush1.msra.mxu0 0.0
    %1875 = vmatprep.subr.mxu0 0.0
    %1876 = vmatpush1.msra.mxu0 0.0
    %1877 = vmatprep.subr.mxu0 0.0
    %1878 = vmatpush1.msra.mxu0 0.0
    %1879 = vmatprep.subr.mxu0 0.0
    %1880 = vmatpush1.msra.mxu0 0.0
    %1881 = vmatprep.subr.mxu0 0.0
    %1882 = vmatpush1.msra.mxu0 0.0
    %1883 = vmatprep.subr.mxu0 0.0
    %1884 = vmatpush1.msra.mxu0 0.0
    %1885 = vmatprep.subr.mxu0 0.0
    %1886 = vmatpush1.msra.mxu0 0.0
    %1887 = vmatprep.mubr.f32.mxu0 0.0
    %1888 = vmatmul.mubr.f32.gmra.mrb[0].mxu0 %v1818
    %v1889 = vpop.f32.mrb[0].mxu0
    %v1890 = vadd.f32 %v1815, %v1889
    %v1891 = vpop.f32.mrb[0].mxu0
    %1892 = vmatprep.mubr.f32.mxu0 0.0
    %1893 = vmatmul.mubr.f32.gmra.mrb[0].mxu0 %v1821
    %v1894 = vpop.f32.mrb[0].mxu0
    %v1895 = vadd.f32 %v1815, %v1894
    %v1896 = vpop.f32.mrb[0].mxu0
    %1897 = vdwg.mxu0
    %1898 = vst.msk [vmem:[#allocation10] sm:$0xff] %vm89, %v1890
    %1899 = vst.msk [vmem:[#allocation10 + $0x8] sm:$0xff] %vm89, %v1895
    // Predicated region
    $region38: #{tpu_custom_call.1} parent=1 // pred_check
      _
    $region39: #{tpu_custom_call.1} parent=1 // pred_check_branch
      %1901 = sbr.rel (0) target = $region41
    $region40: #{tpu_custom_call.1} parent=1 // pred_region
      %s1903 = ssub.s32 256, 256
      %1904 = vsyncadd [#allocation4], %s1903
      %s1905 = sshll.u32 [#allocation10], 4
      %s1906 = int_to_ptr.vmem [resolvable:$true] %s1905
      %1911 = dma.vmem_to_hbm [thread:$0]  %s1906, 256, %s5, [#allocation4], 128, 128, 8
    $region41: #{tpu_custom_call.1} parent=1 // pred_fallthru
      _
    // Predicated region
    $region42: #{tpu_custom_call.1} parent=1 // pred_check
      _
    $region43: #{tpu_custom_call.1} parent=1 // pred_check_branch
      %1913 = sbr.rel (0) target = $region45
    $region44: #{tpu_custom_call.1} parent=1 // pred_region
      %1914 = dma.done [#allocation4], 256
    $region45: #{tpu_custom_call.1} parent=1 // pred_fallthru
      _
    %1915 = vsyncpa [#allocation3], 1
    %1916 = vsyncpa [#allocation6], 1
    %1917 = vsyncpa [#allocation9], 1
    %1918 = vsyncpa [#allocation4], 1

</llo_original>
